<compile_context>
chip_gen: v6e
topology: v6e:2x2x1
jax: 0.10.0
libtpu: 0.0.40
codegen_flags: <defaults>
</compile_context>

<pallas_src>
import functools

import jax
import jax.numpy as jnp
from jax import lax
from jax.experimental import pallas as pl
from jax.experimental.pallas import tpu as pltpu


def _round_up(x, m):
    return (x + m - 1) // m * m


# --------------------------------------------------------------------------
# Pallas kernel: tiled bf16 matmul, f32 accumulate, fused affine (+ReLU)
# --------------------------------------------------------------------------
def _matmul_affine_kernel(a_ref, b_ref, s_ref, c_ref, o_ref, acc_ref, *, relu):
    @pl.when(pl.program_id(2) == 0)
    def _():
        acc_ref[...] = jnp.zeros_like(acc_ref)

    acc_ref[...] += jnp.dot(a_ref[...], b_ref[...],
                            preferred_element_type=jnp.float32)

    @pl.when(pl.program_id(2) == pl.num_programs(2) - 1)
    def _():
        y = acc_ref[...] * s_ref[...] + c_ref[...]
        if relu:
            y = jnp.maximum(y, 0.0)
        o_ref[...] = y


def pallas_matmul_affine(A, Bp, Sp, Cp, *, tk, tn, relu, out_cols):
    """out[m,n] = act( (A @ B)[m,n] * scale[n] + bias[n] ), f32 output.

    A : (M, K) activations (cast to bf16 here if needed).
    Bp: (Kp, Np) pre-padded bf16 weights  (Kp % tk == 0, Np % tn == 0).
    Sp, Cp: (1, Np) f32 folded-BN scale / bias.
    """
    M, K = A.shape
    Kp, Np = Bp.shape

    tm = min(256, _round_up(M, 8))
    Mp = _round_up(M, tm)

    # v7x megacore: make sure there are >=2 parallel tiles when possible.
    if (Mp // tm) * (Np // tn) < 2 and tn > 128:
        tn = 128

    Ap = A if A.dtype == jnp.bfloat16 else A.astype(jnp.bfloat16)
    if (Mp, Kp) != (M, K):
        Ap = jnp.pad(Ap, ((0, Mp - M), (0, Kp - K)))

    grid = (Mp // tm, Np // tn, Kp // tk)
    kernel = functools.partial(_matmul_affine_kernel, relu=relu)

    cost = pl.CostEstimate(
        flops=2 * M * K * out_cols,
        transcendentals=0,
        bytes_accessed=M * K * 2 + Kp * Np * 2 + M * out_cols * 4,
    )

    out = pl.pallas_call(
        kernel,
        out_shape=jax.ShapeDtypeStruct((Mp, Np), jnp.float32),
        grid_spec=pltpu.PrefetchScalarGridSpec(
            num_scalar_prefetch=0,
            grid=grid,
            in_specs=[
                pl.BlockSpec((tm, tk), lambda i, j, k: (i, k)),
                pl.BlockSpec((tk, tn), lambda i, j, k: (k, j)),
                pl.BlockSpec((1, tn), lambda i, j, k: (0, j)),
                pl.BlockSpec((1, tn), lambda i, j, k: (0, j)),
            ],
            out_specs=pl.BlockSpec((tm, tn), lambda i, j, k: (i, j)),
            scratch_shapes=[pltpu.VMEM((tm, tn), jnp.float32)],
        ),
        compiler_params=pltpu.CompilerParams(
            dimension_semantics=("parallel", "parallel", "arbitrary"),
            vmem_limit_bytes=48 * 1024 * 1024,
        ),
        cost_estimate=cost,
    )(Ap, Bp, Sp, Cp)
    return out[:M, :out_cols]


# --------------------------------------------------------------------------
# Pallas kernel: batched gram matrix  gram[n] = X[n]^T @ X[n]
# --------------------------------------------------------------------------
def _gram_kernel(x_ref, o_ref):
    x = x_ref[...]                                   # (HWp, Cp) f32
    o_ref[...] = lax.dot_general(x, x, (((0,), (0,)), ((), ())),
                                 preferred_element_type=jnp.float32)


def gram_matrix(feature):
    """feature: (N, H, W, C) NHWC -> (N, C, C), single batched pallas_call."""
    N, H, W, C = feature.shape
    HW = H * W
    HWp, Cp = _round_up(HW, 8), _round_up(C, 128)
    X = feature.reshape(N, HW, C).astype(jnp.float32)
    if (HWp, Cp) != (HW, C):
        X = jnp.pad(X, ((0, 0), (0, HWp - HW), (0, Cp - C)))

    out = pl.pallas_call(
        _gram_kernel,
        out_shape=jax.ShapeDtypeStruct((N, Cp, Cp), jnp.float32),
        grid_spec=pltpu.PrefetchScalarGridSpec(
            num_scalar_prefetch=0,
            grid=(N,),
            in_specs=[pl.BlockSpec((None, HWp, Cp), lambda b: (b, 0, 0))],
            out_specs=pl.BlockSpec((None, Cp, Cp), lambda b: (b, 0, 0)),
        ),
        compiler_params=pltpu.CompilerParams(
            dimension_semantics=("parallel",)),
    )(X)
    return out[:, :C, :C]


# --------------------------------------------------------------------------
# Conv glue (NHWC im2col) around the Pallas matmul kernel
# --------------------------------------------------------------------------
def _im2col_nhwc(x, k, stride, padding, dilation):
    """x: (N, H, W, C) -> (N*Ho*Wo, k*k*C) with (kh, kw, cin) column order."""
    N, H, W, C = x.shape
    xp = jnp.pad(x, ((0, 0), (padding, padding), (padding, padding), (0, 0)))
    Hout = (H + 2 * padding - dilation * (k - 1) - 1) // stride + 1
    Wout = (W + 2 * padding - dilation * (k - 1) - 1) // stride + 1
    taps = []
    for i in range(k):
        for j in range(k):
            h0, w0 = i * dilation, j * dilation
            taps.append(xp[:, h0:h0 + stride * (Hout - 1) + 1:stride,
                              w0:w0 + stride * (Wout - 1) + 1:stride, :])
    cols = jnp.stack(taps, axis=3)                       # (N, Ho, Wo, k*k, C)
    A = cols.reshape(N * Hout * Wout, k * k * C)
    return A, Hout, Wout


def apply_conv(p, x, stride=1, padding=0, dilation=1, relu=True):
    """NHWC Conv2d (+ folded BN) + optional ReLU via the Pallas matmul kernel."""
    N = x.shape[0]
    k = p["k"]
    xb = x.astype(jnp.bfloat16)
    if k == 1 and stride == 1 and padding == 0:
        Hout, Wout = x.shape[1], x.shape[2]
        A = xb.reshape(N * Hout * Wout, x.shape[3])
    else:
        A, Hout, Wout = _im2col_nhwc(xb, k, stride, padding, dilation)
    y = pallas_matmul_affine(A, p["Bp"], p["Sp"], p["Cp"],
                             tk=p["tk"], tn=p["tn"], relu=relu,
                             out_cols=p["cout"])
    return y.reshape(N, Hout, Wout, p["cout"])


# --------------------------------------------------------------------------
# Tiny ops routed to plain XLA (padding/launch overhead would dominate)
# --------------------------------------------------------------------------
def _interp_matrix(n_in, n_out):
    """Bilinear (align_corners=True) 1-D interpolation matrix (n_out, n_in)."""
    if n_in == 1:
        return jnp.ones((n_out, 1), jnp.float32)
    if n_out == 1:
        return jnp.zeros((1, n_in), jnp.float32).at[0, 0].set(1.0)
    s = jnp.arange(n_out, dtype=jnp.float32) * (n_in - 1) / (n_out - 1)
    i0 = jnp.clip(jnp.floor(s).astype(jnp.int32), 0, n_in - 1)
    i1 = jnp.clip(i0 + 1, 0, n_in - 1)
    f = s - i0.astype(jnp.float32)
    m = jnp.zeros((n_out, n_in), jnp.float32)
    r = jnp.arange(n_out)
    m = m.at[r, i0].add(1.0 - f)
    m = m.at[r, i1].add(f)
    return m


def bilinear_resize(x, Hout, Wout):
    """F.interpolate(mode='bilinear', align_corners=True) on NHWC tensors."""
    N, Hin, Win, C = x.shape
    if Hin == 1 and Win == 1:
        return jnp.broadcast_to(x, (N, Hout, Wout, C))
    Mh = _interp_matrix(Hin, Hout)          # (Hout, Hin)
    Mw = _interp_matrix(Win, Wout)          # (Wout, Win)
    y = jnp.einsum('oh,nhwc->nowc', Mh, x)
    y = jnp.einsum('pw,nowc->nopc', Mw, y)
    return y


def conv_g_apply(p, g):
    """Conv2d(1,8,3,s4,p1)+BN+ReLU -> Conv2d(8,1,3,s4,p1)+ReLU on NHWC gram image."""
    dn = ('NHWC', 'HWIO', 'NHWC')
    y = lax.conv_general_dilated(g, p["g1_w"], (4, 4), [(1, 1), (1, 1)],
                                 dimension_numbers=dn)
    y = jnp.maximum(y * p["g1_scale"] + p["g1_bias"], 0.0)
    y = lax.conv_general_dilated(y, p["g2_w"], (4, 4), [(1, 1), (1, 1)],
                                 dimension_numbers=dn)
    return jnp.maximum(y, 0.0)


# --------------------------------------------------------------------------
# Deterministic parameter construction (weights pre-packed for the kernel)
# --------------------------------------------------------------------------
def _conv_weight(key, cout, cin, k):
    fan_in = cin * k * k
    return jax.random.normal(key, (cout, cin, k, k), jnp.float32) * (2.0 / fan_in) ** 0.5


def _bn_fold(key, c, eps=1e-5):
    k1, k2, k3, k4 = jax.random.split(key, 4)
    gamma = jax.random.uniform(k1, (c,), minval=0.5, maxval=1.5)
    beta = 0.1 * jax.random.normal(k2, (c,))
    mean = 0.1 * jax.random.normal(k3, (c,))
    var = jax.random.uniform(k4, (c,), minval=0.5, maxval=1.5)
    scale = gamma / jnp.sqrt(var + eps)
    bias = beta - mean * scale
    return scale.astype(jnp.float32), bias.astype(jnp.float32)


def _tile_policy(K, Nc):
    """Pick (tk, Kp, tn, Np) once at init so weights can be pre-padded."""
    Kr = _round_up(K, 128)
    if Kr <= 2048:
        tk, Kp = Kr, Kr
    else:
        nsteps = -(-Kr // 2048)
        tk = _round_up(-(-Kr // nsteps), 128)
        Kp = tk * nsteps
    tn = min(256, _round_up(Nc, 128))
    Np = _round_up(Nc, tn)
    return tk, Kp, tn, Np


def _make_conv_bn(key, cin, cout, k):
    """Pre-pack Conv2d(bias=False)+BN for the Pallas path (bf16 weights, f32 affine)."""
    kw_, kb_ = jax.random.split(key)
    w = _conv_weight(kw_, cout, cin, k)                  # (cout, cin, k, k)
    scale, bias = _bn_fold(kb_, cout)
    K = cin * k * k
    tk, Kp, tn, Np = _tile_policy(K, cout)
    # NHWC im2col column order = (kh, kw, cin)
    B = w.transpose(2, 3, 1, 0).reshape(K, cout)
    Bp = jnp.zeros((Kp, Np), jnp.bfloat16).at[:K, :cout].set(B.astype(jnp.bfloat16))
    Sp = jnp.zeros((1, Np), jnp.float32).at[0, :cout].set(scale)
    Cp = jnp.zeros((1, Np), jnp.float32).at[0, :cout].set(bias)
    return {"Bp": Bp, "Sp": Sp, "Cp": Cp, "k": k, "cout": cout, "tk": tk, "tn": tn}


def init_params(key, nclass, dilations):
    low_channels, high_channels = 256, 2048
    out_channels = high_channels // 8                    # 256
    keys = jax.random.split(key, 20)
    p = {"dilations": dilations}
    # backbone stub (see TODO at top): c1 @ stride 4 (256ch), c4 @ stride 16 (2048ch)
    p["stem1"] = _make_conv_bn(keys[0], 3, low_channels, 3)
    p["stem2"] = _make_conv_bn(keys[1], low_channels, high_channels, 3)
    # ASPP head
    p["b0"] = _make_conv_bn(keys[2], high_channels, out_channels, 1)
    p["b1"] = _make_conv_bn(keys[3], high_channels, out_channels, 3)
    p["b2"] = _make_conv_bn(keys[4], high_channels, out_channels, 3)
    p["b3"] = _make_conv_bn(keys[5], high_channels, out_channels, 3)
    p["b4"] = _make_conv_bn(keys[6], high_channels, out_channels, 1)
    p["project"] = _make_conv_bn(keys[7], 5 * out_channels, out_channels, 1)
    # decoder
    p["reduce"] = _make_conv_bn(keys[8], low_channels, 48, 1)
    p["fuse_a"] = _make_conv_bn(keys[9], out_channels + 48, 256, 3)
    p["fuse_b"] = _make_conv_bn(keys[10], 256, 256, 3)
    # classifier: 1x1 conv 256 -> nclass with bias (tiny, plain jnp matmul)
    kcw, kcb = jax.random.split(keys[11])
    p["cls_w"] = _conv_weight(kcw, nclass, 256, 1).reshape(nclass, 256)
    p["cls_b"] = 0.01 * jax.random.normal(kcb, (nclass,), jnp.float32)
    # conv_g on the gram image (tiny, plain lax.conv)
    kg1, kg1b, kg2 = jax.random.split(keys[12], 3)
    p["g1_w"] = _conv_weight(kg1, 8, 1, 3).transpose(2, 3, 1, 0)   # HWIO
    p["g1_scale"], p["g1_bias"] = _bn_fold(kg1b, 8)
    p["g2_w"] = _conv_weight(kg2, 1, 8, 3).transpose(2, 3, 1, 0)   # HWIO
    return p


# --------------------------------------------------------------------------
# Forward pass (need_fp=False path), all NHWC internally
# --------------------------------------------------------------------------
def aspp_head(p, c4):
    r1, r2, r3 = p["dilations"]
    feat0 = apply_conv(p["b0"], c4)
    feat1 = apply_conv(p["b1"], c4, padding=r1, dilation=r1)
    feat2 = apply_conv(p["b2"], c4, padding=r2, dilation=r2)
    feat3 = apply_conv(p["b3"], c4, padding=r3, dilation=r3)
    pooled = jnp.mean(c4, axis=(1, 2), keepdims=True)        # AdaptiveAvgPool2d(1)
    feat4 = apply_conv(p["b4"], pooled)
    feat4 = bilinear_resize(feat4, c4.shape[1], c4.shape[2])  # align_corners broadcast
    y = jnp.concatenate([feat0, feat1, feat2, feat3, feat4], axis=-1)
    return apply_conv(p["project"], y)                        # Dropout2d -> identity (eval)


def decode(p, c1, c4):
    c4 = aspp_head(p, c4)
    c4 = bilinear_resize(c4, c1.shape[1], c1.shape[2])
    c1 = apply_conv(p["reduce"], c1)
    feature = jnp.concatenate([c1, c4], axis=-1)
    feature = apply_conv(p["fuse_a"], feature, padding=1)
    feature = apply_conv(p["fuse_b"], feature, padding=1)
    out = jnp.einsum('nhwc,oc->nhwo', feature, p["cls_w"]) + p["cls_b"]
    return out, feature


def forward(p, x):
    """x: (N, 3, H, W) NCHW (PyTorch convention); returns NCHW (out, gram_feature)."""
    h, w = x.shape[-2:]
    xh = jnp.transpose(x, (0, 2, 3, 1))                       # to NHWC once at the edge
    # backbone stub
    c1 = apply_conv(p["stem1"], xh, stride=4, padding=1)      # (N, H/4,  W/4,  256)
    c4 = apply_conv(p["stem2"], c1, stride=4, padding=1)      # (N, H/16, W/16, 2048)
    # decoder
    out, feature = decode(p, c1, c4)
    # gram branch
    gram = gram_matrix(feature)                               # (N, C, C)
    g = conv_g_apply(p, gram[..., None])                      # (N, hg, wg, 1)
    # final upsample
    out = bilinear_resize(out, h, w)                          # (N, H, W, nclass)
    return jnp.transpose(out, (0, 3, 1, 2)), jnp.transpose(g, (0, 3, 1, 2))


# --------------------------------------------------------------------------
if __name__ == "__main__":
    key = jax.random.PRNGKey(0)
    kp, kx = jax.random.split(key)

    nclass = 8
    dilations = (6, 12, 18)
    params = init_params(kp, nclass, dilations)

    # small input: N=2, 3 channels, 64x64 spatial
    x = jax.random.normal(kx, (2, 3, 64, 64), jnp.float32)

    out, gram_feature = forward(params, x)
    jax.block_until_ready(out)
    jax.block_until_ready(gram_feature)

    assert out.shape == (2, nclass, 64, 64), out.shape
    assert gram_feature.shape == (2, 1, 16, 16), gram_feature.shape
    assert bool(jnp.all(jnp.isfinite(out))) and bool(jnp.all(jnp.isfinite(gram_feature)))

    print("KERNEL_OK")
</pallas_src>

<mosaic_0001>
module attributes {stable_mosaic.version = 11 : i64} {
  func.func @_matmul_affine_kernel(%arg0: i32, %arg1: i32, %arg2: i32, %arg3: memref<256x128xbf16, #tpu.memory_space<vmem>>, %arg4: memref<128x256xbf16, #tpu.memory_space<vmem>>, %arg5: memref<1x256xf32, #tpu.memory_space<vmem>>, %arg6: memref<1x256xf32, #tpu.memory_space<vmem>>, %arg7: memref<256x256xf32, #tpu.memory_space<vmem>>, %arg8: memref<256x256xf32, #tpu.memory_space<vmem>>) attributes {dimension_semantics = [#tpu.dimension_semantics<parallel>, #tpu.dimension_semantics<parallel>, #tpu.dimension_semantics<arbitrary>], iteration_bounds = array<i64: 2, 1, 1>, scalar_prefetch = 0 : i64, scratch_operands = 1 : i64, tpu.core_type = #tpu.core_type<tc>, window_params = [{transform_indices = @transform_0, window_bounds = array<i64: 256, 128>}, {transform_indices = @transform_1, window_bounds = array<i64: 128, 256>}, {transform_indices = @transform_2, window_bounds = array<i64: 1, 256>}, {transform_indices = @transform_3, window_bounds = array<i64: 1, 256>}, {transform_indices = @transform_4, window_bounds = array<i64: 256, 256>}]} {
    %c0_i32 = arith.constant 0 : i32
    %0 = arith.cmpi eq, %arg2, %c0_i32 : i32
    %1 = arith.extui %0 : i1 to i32
    %c0_i32_0 = arith.constant 0 : i32
    %2 = arith.cmpi ne, %1, %c0_i32_0 : i32
    scf.if %2 {
      %cst_10 = arith.constant 0.000000e+00 : f32
      %12 = vector.broadcast %cst_10 : f32 to vector<256x256xf32>
      %c0_11 = arith.constant 0 : index
      %c0_12 = arith.constant 0 : index
      %13 = vector.load %arg8[%c0_11, %c0_12] : memref<256x256xf32, #tpu.memory_space<vmem>>, vector<256x256xf32>
      tpu.vector_store %arg8[%c0_11, %c0_12], %12 {strides = array<i32>} : memref<256x256xf32, #tpu.memory_space<vmem>>, vector<256x256xf32>,
    } else {
    }
    %c0 = arith.constant 0 : index
    %c0_1 = arith.constant 0 : index
    %3 = vector.load %arg8[%c0, %c0_1] : memref<256x256xf32, #tpu.memory_space<vmem>>, vector<256x256xf32>
    %c0_2 = arith.constant 0 : index
    %c0_3 = arith.constant 0 : index
    %4 = vector.load %arg3[%c0_2, %c0_3] : memref<256x128xbf16, #tpu.memory_space<vmem>>, vector<256x128xbf16>
    %c0_4 = arith.constant 0 : index
    %c0_5 = arith.constant 0 : index
    %5 = vector.load %arg4[%c0_4, %c0_5] : memref<128x256xbf16, #tpu.memory_space<vmem>>, vector<128x256xbf16>
    %cst = arith.constant dense<0.000000e+00> : vector<256x256xf32>
    %6 = tpu.matmul %4, %5, %cst {dimension_numbers = #tpu.dot_dimension_numbers<[1], [0], [0], [1], [0, 0, 1, 1], [], []>} : vector<256x128xbf16>, vector<128x256xbf16>, vector<256x256xf32> -> vector<256x256xf32>
    %7 = arith.addf %3, %6 : vector<256x256xf32>
    %c0_6 = arith.constant 0 : index
    %c0_7 = arith.constant 0 : index
    %8 = vector.load %arg8[%c0_6, %c0_7] : memref<256x256xf32, #tpu.memory_space<vmem>>, vector<256x256xf32>
    tpu.vector_store %arg8[%c0_6, %c0_7], %7 {strides = array<i32>} : memref<256x256xf32, #tpu.memory_space<vmem>>, vector<256x256xf32>,
    %c0_i32_8 = arith.constant 0 : i32
    %9 = arith.cmpi eq, %arg2, %c0_i32_8 : i32
    %10 = arith.extui %9 : i1 to i32
    %c0_i32_9 = arith.constant 0 : i32
    %11 = arith.cmpi ne, %10, %c0_i32_9 : i32
    scf.if %11 {
      %c0_10 = arith.constant 0 : index
      %c0_11 = arith.constant 0 : index
      %12 = vector.load %arg8[%c0_10, %c0_11] : memref<256x256xf32, #tpu.memory_space<vmem>>, vector<256x256xf32>
      %c0_12 = arith.constant 0 : index
      %c0_13 = arith.constant 0 : index
      %13 = vector.load %arg5[%c0_12, %c0_13] : memref<1x256xf32, #tpu.memory_space<vmem>>, vector<1x256xf32>
      %14 = vector.broadcast %13 : vector<1x256xf32> to vector<256x256xf32>
      %15 = arith.mulf %12, %14 : vector<256x256xf32>
      %c0_14 = arith.constant 0 : index
      %c0_15 = arith.constant 0 : index
      %16 = vector.load %arg6[%c0_14, %c0_15] : memref<1x256xf32, #tpu.memory_space<vmem>>, vector<1x256xf32>
      %17 = vector.broadcast %16 : vector<1x256xf32> to vector<256x256xf32>
      %18 = arith.addf %15, %17 : vector<256x256xf32>
      %cst_16 = arith.constant 0.000000e+00 : f32
      %19 = vector.broadcast %cst_16 : f32 to vector<256x256xf32>
      %20 = arith.maximumf %18, %19 : vector<256x256xf32>
      %c0_17 = arith.constant 0 : index
      %c0_18 = arith.constant 0 : index
      %21 = vector.load %arg7[%c0_17, %c0_18] : memref<256x256xf32, #tpu.memory_space<vmem>>, vector<256x256xf32>
      tpu.vector_store %arg7[%c0_17, %c0_18], %20 {strides = array<i32>} : memref<256x256xf32, #tpu.memory_space<vmem>>, vector<256x256xf32>,
    } else {
    }
    return
  }
  func.func @transform_0(%arg0: i32, %arg1: i32, %arg2: i32) -> (i32, i32) {
    %c0_i32 = arith.constant 0 : i32
    return %arg0, %arg2 : i32, i32
  }
  func.func @transform_1(%arg0: i32, %arg1: i32, %arg2: i32) -> (i32, i32) {
    %c0_i32 = arith.constant 0 : i32
    return %arg2, %arg1 : i32, i32
  }
  func.func @transform_2(%arg0: i32, %arg1: i32, %arg2: i32) -> (i32, i32) {
    %c0_i32 = arith.constant 0 : i32
    %c0_i32_0 = arith.constant 0 : i32
    return %c0_i32, %arg1 : i32, i32
  }
  func.func @transform_3(%arg0: i32, %arg1: i32, %arg2: i32) -> (i32, i32) {
    %c0_i32 = arith.constant 0 : i32
    %c0_i32_0 = arith.constant 0 : i32
    return %c0_i32, %arg1 : i32, i32
  }
  func.func @transform_4(%arg0: i32, %arg1: i32, %arg2: i32) -> (i32, i32) {
    %c0_i32 = arith.constant 0 : i32
    return %arg0, %arg1 : i32, i32
  }
}

</mosaic_0001>

<llo_original>
// kernel: tpu_custom_call.1
$region0: #{tpu_custom_call.1}
  #allocation0 [shape = 'u32[]', space=smem, size = 0x4, offset = 0x4, fixed_abs, tag = 'smem constant byte address 0x4 - core index']
  #allocation1 [shape = 'u32[144,128]{1,0:T(1,128)}', space=vmem, size = 0x12000, scoped, tag = 'internal scratch']
  #allocation2 [shape = 'f32[256,256]{1,0:T(8,128)}', space=vmem, size = 0x40000, scoped, tag = 'scratch operand']
  %s0 = inlined_call_operand.hbm [shape: bf16[512,128], index: 0, kind: input, shape index: {}]
  %s1 = inlined_call_operand.hbm [shape: bf16[128,256], index: 1, kind: input, shape index: {}]
  %s2 = inlined_call_operand.vmem [shape: f32[1,256], index: 2, kind: input, shape index: {}]
  %s3 = inlined_call_operand.vmem [shape: f32[1,256], index: 3, kind: input, shape index: {}]
  %s4 = inlined_call_operand.hbm [shape: f32[512,256], index: 4, kind: output, shape index: {}]
  %s5 = sld [smem:[#allocation0]]
  $region65: #{tpu_custom_call.1} parent=0
    _
  %s7 = ssub.s32 1, %s5
  %s8 = scalar_select 0, %s7, %s5
  $region1: #{tpu_custom_call.1} parent=0
    #allocation3 [shape = 'u8[131072]{0}', space=vmem, size = 0x20000, scoped, tag = 'input window, operand 0']
    #allocation4 [shape = 's32[2]{0}', space=sflag, size = 0x8, scoped, tag = 'scoped memory for tpu_custom_call.1']
    #allocation5 [shape = 's32[2]{0}', space=sflag, size = 0x8, scoped, tag = 'scoped memory for tpu_custom_call.1']
    #allocation6 [shape = 'u8[65536]{0}', space=vmem, size = 0x10000, scoped, tag = 'input window, operand 1, single buffered']
    #allocation7 [shape = 's32[1]{0}', space=sflag, size = 0x4, scoped, tag = 'scoped memory for tpu_custom_call.1']
    #allocation8 [shape = 'u8[524288]{0}', space=vmem, size = 0x80000, scoped, tag = 'output window, operand 0']
    %9 = vsyncpa [#allocation4], 0
    %s10 = scalar_lea.sflag [#allocation4], 1
    %11 = vsyncpa %s10, 0
    %12 = vsyncpa [#allocation7], 0
    %13 = vsyncpa [#allocation5], 0
    %s14 = scalar_lea.sflag [#allocation5], 1
    %15 = vsyncpa %s14, 0
    loop: start=0, step=1, limit=4
    $region2: #{tpu_custom_call.1} parent=1 // loop_pre_header
      _
    $region3: #{tpu_custom_call.1} parent=1 // loop_header
      %s17 = sphi 0, %s21
      %p18 = scmp.ge.s32.totalorder %s17, 4
      %s24 = sphi 0, %s43
      %s25 = sphi 0, %s39
      %s26 = sphi 0, %s35
      %s27 = sphi 0, %s24
      %s28 = sphi 0, %s25
      %s29 = sphi 0, %s26
      %s30 = sphi 0, %s27
      %s31 = sphi 0, %s28
      %s32 = sphi 0, %s29
      %s48 = sphi 0, %s50
      %s51 = sphi 0, %s48
      %s52 = sphi 0, %s51
      %s68 = sphi 0, %s52
      %s76 = sphi 0, %s78
      %s79 = sphi 0, %s76
      %s80 = sphi 0, %s79
      %s96 = sphi 0, %s80
      %s102 = sphi 0, %s104
      %s105 = sphi 0, %s102
      %s106 = sphi 0, %s105
      %s122 = sphi 0, %s106
      %s128 = sphi 0, %s130
      %s131 = sphi 0, %s128
      %s132 = sphi 0, %s131
      %s148 = sphi 0, %s132
      %s156 = sphi 0, %s158
      %s159 = sphi 0, %s156
      %s160 = sphi 0, %s159
      %s176 = sphi 0, %s160
    $region4: #{tpu_custom_call.1} parent=1 // loop_header_branch
      %20 = sbr.rel (%p18) target = $region8
    $region5: #{tpu_custom_call.1} parent=1 // loop_body
      %s22 = ssub.s32 %s17, 1
      %s23 = ssub.s32 %s17, 2
      %s33 = sadd.s32 1, %s26
      %p34 = scmp.ge.s32.totalorder %s33, 1
      %s35 = scalar_select %p34, 0, %s33
      %s36 = sadd.s32 1, %s25
      %s37 = scalar_select %p34, %s36, %s25
      %p38 = scmp.ge.s32.totalorder %s37, 1
      %s39 = scalar_select %p38, 0, %s37
      %s40 = sadd.s32 1, %s24
      %s41 = scalar_select %p38, %s40, %s24
      %p42 = scmp.ge.s32.totalorder %s41, 2
      %s43 = scalar_select %p42, 0, %s41
      %s44 = ssub.s32 %s24, %s43
      %s45 = ssub.s32 %s26, %s35
      %s46 = sor.u32 %s44, %s45
      %p47 = scmp.eq.s32.totalorder %s46, 0
      %s49 = sadd.s32 %s48, 1
      %s50 = scalar_select %p47, %s48, %s49
      %p53 = pneg %p47
      %p54 = scmp.eq.s32.totalorder %s17, 1
      %p55 = por %p53, %p54
      %p56 = scmp.ne.s32.totalorder %s48, %s51
      %p57 = scmp.eq.s32.totalorder %s17, 0
      %p58 = por %p56, %p57
      %p59 = scmp.ne.s32.totalorder %s48, %s51
      %p60 = scmp.eq.s32.totalorder %s22, 1
      %p61 = por %p59, %p60
      %p62 = scmp.ne.s32.totalorder %s51, %s52
      %p63 = scmp.eq.s32.totalorder %s22, 0
      %p64 = por %p62, %p63
      %p65 = scmp.ne.s32.totalorder %s51, %s52
      %p66 = scmp.eq.s32.totalorder %s23, 1
      %p67 = por %p65, %p66
      %p69 = scmp.ne.s32.totalorder %s52, %s68
      %p70 = scmp.eq.s32.totalorder %s23, 0
      %p71 = por %p69, %p70
      %s72 = ssub.s32 %s26, %s35
      %s73 = ssub.s32 %s25, %s39
      %s74 = sor.u32 %s72, %s73
      %p75 = scmp.eq.s32.totalorder %s74, 0
      %s77 = sadd.s32 %s76, 1
      %s78 = scalar_select %p75, %s76, %s77
      %p81 = pneg %p75
      %p82 = scmp.eq.s32.totalorder %s17, 1
      %p83 = por %p81, %p82
      %p84 = scmp.ne.s32.totalorder %s76, %s79
      %p85 = scmp.eq.s32.totalorder %s17, 0
      %p86 = por %p84, %p85
      %p87 = scmp.ne.s32.totalorder %s76, %s79
      %p88 = scmp.eq.s32.totalorder %s22, 1
      %p89 = por %p87, %p88
      %p90 = scmp.ne.s32.totalorder %s79, %s80
      %p91 = scmp.eq.s32.totalorder %s22, 0
      %p92 = por %p90, %p91
      %p93 = scmp.ne.s32.totalorder %s79, %s80
      %p94 = scmp.eq.s32.totalorder %s23, 1
      %p95 = por %p93, %p94
      %p97 = scmp.ne.s32.totalorder %s80, %s96
      %p98 = scmp.eq.s32.totalorder %s23, 0
      %p99 = por %p97, %p98
      %s100 = ssub.s32 %s25, %s39
      %p101 = scmp.eq.s32.totalorder %s100, 0
      %s103 = sadd.s32 %s102, 1
      %s104 = scalar_select %p101, %s102, %s103
      %p107 = pneg %p101
      %p108 = scmp.eq.s32.totalorder %s17, 1
      %p109 = por %p107, %p108
      %p110 = scmp.ne.s32.totalorder %s102, %s105
      %p111 = scmp.eq.s32.totalorder %s17, 0
      %p112 = por %p110, %p111
      %p113 = scmp.ne.s32.totalorder %s102, %s105
      %p114 = scmp.eq.s32.totalorder %s22, 1
      %p115 = por %p113, %p114
      %p116 = scmp.ne.s32.totalorder %s105, %s106
      %p117 = scmp.eq.s32.totalorder %s22, 0
      %p118 = por %p116, %p117
      %p119 = scmp.ne.s32.totalorder %s105, %s106
      %p120 = scmp.eq.s32.totalorder %s23, 1
      %p121 = por %p119, %p120
      %p123 = scmp.ne.s32.totalorder %s106, %s122
      %p124 = scmp.eq.s32.totalorder %s23, 0
      %p125 = por %p123, %p124
      %s126 = ssub.s32 %s25, %s39
      %p127 = scmp.eq.s32.totalorder %s126, 0
      %s129 = sadd.s32 %s128, 1
      %s130 = scalar_select %p127, %s128, %s129
      %p133 = pneg %p127
      %p134 = scmp.eq.s32.totalorder %s17, 1
      %p135 = por %p133, %p134
      %p136 = scmp.ne.s32.totalorder %s128, %s131
      %p137 = scmp.eq.s32.totalorder %s17, 0
      %p138 = por %p136, %p137
      %p139 = scmp.ne.s32.totalorder %s128, %s131
      %p140 = scmp.eq.s32.totalorder %s22, 1
      %p141 = por %p139, %p140
      %p142 = scmp.ne.s32.totalorder %s131, %s132
      %p143 = scmp.eq.s32.totalorder %s22, 0
      %p144 = por %p142, %p143
      %p145 = scmp.ne.s32.totalorder %s131, %s132
      %p146 = scmp.eq.s32.totalorder %s23, 1
      %p147 = por %p145, %p146
      %p149 = scmp.ne.s32.totalorder %s132, %s148
      %p150 = scmp.eq.s32.totalorder %s23, 0
      %p151 = por %p149, %p150
      %s152 = ssub.s32 %s24, %s43
      %s153 = ssub.s32 %s25, %s39
      %s154 = sor.u32 %s152, %s153
      %p155 = scmp.eq.s32.totalorder %s154, 0
      %s157 = sadd.s32 %s156, 1
      %s158 = scalar_select %p155, %s156, %s157
      %p161 = pneg %p155
      %p162 = scmp.eq.s32.totalorder %s17, 1
      %p163 = por %p161, %p162
      %p164 = scmp.ne.s32.totalorder %s156, %s159
      %p165 = scmp.eq.s32.totalorder %s17, 0
      %p166 = por %p164, %p165
      %p167 = scmp.ne.s32.totalorder %s156, %s159
      %p168 = scmp.eq.s32.totalorder %s22, 1
      %p169 = por %p167, %p168
      %p170 = scmp.ne.s32.totalorder %s159, %s160
      %p171 = scmp.eq.s32.totalorder %s22, 0
      %p172 = por %p170, %p171
      %p173 = scmp.ne.s32.totalorder %s159, %s160
      %p174 = scmp.eq.s32.totalorder %s23, 1
      %p175 = por %p173, %p174
      %p177 = scmp.ne.s32.totalorder %s160, %s176
      %p178 = scmp.eq.s32.totalorder %s23, 0
      %p179 = por %p177, %p178
      %p180 = scmp.le.s32.totalorder 1, %s17
      %p181 = scmp.lt.s32.totalorder %s17, 3
      %p182 = pnand %p180, %p181
      %p183 = pneg %p182
      // Predicated region
      $region9: #{tpu_custom_call.1} parent=5 // pred_check
        _
      $region10: #{tpu_custom_call.1} parent=5 // pred_check_branch
        %185 = sbr.rel (%p182) target = $region12
      $region11: #{tpu_custom_call.1} parent=5 // pred_region
        %s186 = ssub.s32 %s17, 1
        // Predicated region
        $region13: #{tpu_custom_call.1} parent=11 // pred_check
          %p187 = pneg %p92
        $region14: #{tpu_custom_call.1} parent=11 // pred_check_branch
          %189 = sbr.rel (%p187) target = $region16
        $region15: #{tpu_custom_call.1} parent=11 // pred_region
          %s190 = smul.u32 16, %s29
          %s191 = smul.u32 2, %s28
          %s193 = ssub.s32 2048, 2048
          %194 = vsyncadd [#allocation7], %s193
          %s195 = smul.addr %s190, 2
          %s196 = sadd.s32 %s191, %s195
          %s197 = smul.addr %s196, 64
          %s198 = scalar_lea.hbm %s1, %s197
          %s199 = sshll.u32 [#allocation6], 4
          %s200 = int_to_ptr.vmem [resolvable:$true] %s199
          %205 = dma.hbm_to_vmem [thread:$0]  %s198, 2048, %s200, [#allocation7], 128, 128, 8
        $region16: #{tpu_custom_call.1} parent=11 // pred_fallthru
          _
        // Predicated region
        $region17: #{tpu_custom_call.1} parent=11 // pred_check
          %p206 = pneg %p118
        $region18: #{tpu_custom_call.1} parent=11 // pred_check_branch
          %208 = sbr.rel (%p206) target = $region20
        $region19: #{tpu_custom_call.1} parent=11 // pred_region
          %s209 = smul.u32 2, %s28
          %p210 = scmp.lt.s32.totalorder %s209, 1
          %s211 = scalar_select %p210, %s209, 1
          %s212 = scalar_lea.vmem %s2, %s211
          %s213 = smul.u32 2, %s28
        $region20: #{tpu_custom_call.1} parent=11 // pred_fallthru
          _
        // Predicated region
        $region21: #{tpu_custom_call.1} parent=11 // pred_check
          %p214 = pneg %p144
        $region22: #{tpu_custom_call.1} parent=11 // pred_check_branch
          %216 = sbr.rel (%p214) target = $region24
        $region23: #{tpu_custom_call.1} parent=11 // pred_region
          %s217 = smul.u32 2, %s28
          %p218 = scmp.lt.s32.totalorder %s217, 1
          %s219 = scalar_select %p218, %s217, 1
          %s220 = scalar_lea.vmem %s3, %s219
          %s221 = smul.u32 2, %s28
        $region24: #{tpu_custom_call.1} parent=11 // pred_fallthru
          _
      $region12: #{tpu_custom_call.1} parent=5 // pred_fallthru
        _
      %p222 = scmp.lt.s32.totalorder %s17, 2
      // Predicated region
      $region25: #{tpu_custom_call.1} parent=5 // pred_check
        %p223 = pneg %p222
      $region26: #{tpu_custom_call.1} parent=5 // pred_check_branch
        %225 = sbr.rel (%p223) target = $region28
      $region27: #{tpu_custom_call.1} parent=5 // pred_region
        // Predicated region
        $region29: #{tpu_custom_call.1} parent=27 // pred_check
          %p226 = pneg %p58
        $region30: #{tpu_custom_call.1} parent=27 // pred_check_branch
          %228 = sbr.rel (%p226) target = $region32
        $region31: #{tpu_custom_call.1} parent=27 // pred_region
          %s229 = sand.u32 %s48, 1
          %s230 = scalar_lea.sflag [#allocation4], %s229
          %s231 = sand.u32 %s48, 1
          %s232 = smul.addr %s231, 128
          %s233 = scalar_lea.vmem [#allocation3], %s232
          %s234 = smul.u32 32, %s24
          %s236 = ssub.s32 2048, 2048
          %237 = vsyncadd %s230, %s236
          %s238 = sadd.s32 %s26, %s234
          %s239 = smul.addr %s238, 64
          %s240 = scalar_lea.hbm %s0, %s239
          %s241 = sshll.u32 %s233, 4
          %s242 = int_to_ptr.vmem [resolvable:$true] %s241
          %247 = dma.hbm_to_vmem [thread:$0]  %s240, 2048, %s242, %s230, 64, 64, 4
        $region32: #{tpu_custom_call.1} parent=27 // pred_fallthru
          _
      $region28: #{tpu_custom_call.1} parent=5 // pred_fallthru
        _
      %p248 = scmp.le.s32.totalorder 1, %s17
      %p249 = scmp.lt.s32.totalorder %s17, 3
      %p250 = pnand %p248, %p249
      %p251 = pneg %p250
      // Predicated region
      $region33: #{tpu_custom_call.1} parent=5 // pred_check
        _
      $region34: #{tpu_custom_call.1} parent=5 // pred_check_branch
        %253 = sbr.rel (%p250) target = $region36
      $region35: #{tpu_custom_call.1} parent=5 // pred_region
        %s254 = ssub.s32 %s17, 1
        %s255 = sand.u32 %s51, 1
        %s256 = scalar_lea.sflag [#allocation4], %s255
        %s257 = sand.u32 %s51, 1
        %s258 = smul.addr %s257, 128
        %s259 = scalar_lea.vmem [#allocation3], %s258
        // Predicated region
        $region37: #{tpu_custom_call.1} parent=35 // pred_check
          %p260 = pneg %p64
        $region38: #{tpu_custom_call.1} parent=35 // pred_check_branch
          %262 = sbr.rel (%p260) target = $region40
        $region39: #{tpu_custom_call.1} parent=35 // pred_region
          %263 = dma.done %s256, 2048
        $region40: #{tpu_custom_call.1} parent=35 // pred_fallthru
          _
        // Predicated region
        $region41: #{tpu_custom_call.1} parent=35 // pred_check
          %p264 = pneg %p92
        $region42: #{tpu_custom_call.1} parent=35 // pred_check_branch
          %266 = sbr.rel (%p264) target = $region44
        $region43: #{tpu_custom_call.1} parent=35 // pred_region
          %267 = dma.done [#allocation7], 2048
        $region44: #{tpu_custom_call.1} parent=35 // pred_fallthru
          _
        %s268 = sand.u32 %s51, 1
        %s269 = scalar_lea.sflag [#allocation4], %s268
        %s270 = sand.u32 %s51, 1
        %s271 = smul.addr %s270, 128
        %s272 = scalar_lea.vmem [#allocation3], %s271
        %p273 = pneg %p64
        %p274 = pneg %p61
        %p275 = pneg %p92
        %p276 = pneg %p89
        %s277 = smul.u32 2, %s28
        %p278 = scmp.lt.s32.totalorder %s277, 1
        %s279 = scalar_select %p278, %s277, 1
        %s280 = scalar_lea.vmem %s2, %s279
        %p281 = pneg %p118
        %p282 = pneg %p115
        %s283 = smul.u32 2, %s28
        %p284 = scmp.lt.s32.totalorder %s283, 1
        %s285 = scalar_select %p284, %s283, 1
        %s286 = scalar_lea.vmem %s3, %s285
        %p287 = pneg %p144
        %p288 = pneg %p141
        %p289 = pneg %p172
        %p290 = pneg %p169
        %s291 = sand.u32 %s159, 1
        %s292 = scalar_lea.sflag [#allocation5], %s291
        %s293 = sand.u32 %s159, 1
        %s294 = smul.addr %s293, 512
        %s295 = scalar_lea.vmem [#allocation8], %s294
        %s296 = smul.u32 32, %s27
        %s297 = smul.u32 16, %s29
        %s298 = smul.u32 2, %s28
        %s299 = smul.u32 2, %s28
        %p300 = scmp.lt.s32.totalorder %s299, 1
        %s301 = scalar_select %p300, %s299, 1
        %s302 = scalar_lea.vmem %s2, %s301
        %s303 = smul.u32 2, %s28
        %s304 = smul.u32 2, %s28
        %p305 = scmp.lt.s32.totalorder %s304, 1
        %s306 = scalar_select %p305, %s304, 1
        %s307 = scalar_lea.vmem %s3, %s306
        %s308 = smul.u32 2, %s28
        %s309 = smul.u32 32, %s27
        %s310 = smul.u32 2, %s28
        %p312 = scmp.eq.s32.totalorder %s29, 0
        // Predicated region
        $region45: #{tpu_custom_call.1} parent=35 // pred_check
          %p313 = pneg %p312
        $region46: #{tpu_custom_call.1} parent=35 // pred_check_branch
          %315 = sbr.rel (%p313) target = $region48
        $region47: #{tpu_custom_call.1} parent=35 // pred_region
          %316 = vst [vmem:[#allocation2] sm:$0xff] 0.0
          %317 = vst [vmem:[#allocation2 + $0x8] sm:$0xff] 0.0
          %318 = vst [vmem:[#allocation2 + $0x10] sm:$0xff] 0.0
          %319 = vst [vmem:[#allocation2 + $0x18] sm:$0xff] 0.0
          %320 = vst [vmem:[#allocation2 + $0x20] sm:$0xff] 0.0
          %321 = vst [vmem:[#allocation2 + $0x28] sm:$0xff] 0.0
          %322 = vst [vmem:[#allocation2 + $0x30] sm:$0xff] 0.0
          %323 = vst [vmem:[#allocation2 + $0x38] sm:$0xff] 0.0
          %324 = vst [vmem:[#allocation2 + $0x40] sm:$0xff] 0.0
          %325 = vst [vmem:[#allocation2 + $0x48] sm:$0xff] 0.0
          %326 = vst [vmem:[#allocation2 + $0x50] sm:$0xff] 0.0
          %327 = vst [vmem:[#allocation2 + $0x58] sm:$0xff] 0.0
          %328 = vst [vmem:[#allocation2 + $0x60] sm:$0xff] 0.0
          %329 = vst [vmem:[#allocation2 + $0x68] sm:$0xff] 0.0
          %330 = vst [vmem:[#allocation2 + $0x70] sm:$0xff] 0.0
          %331 = vst [vmem:[#allocation2 + $0x78] sm:$0xff] 0.0
          %332 = vst [vmem:[#allocation2 + $0x80] sm:$0xff] 0.0
          %333 = vst [vmem:[#allocation2 + $0x88] sm:$0xff] 0.0
          %334 = vst [vmem:[#allocation2 + $0x90] sm:$0xff] 0.0
          %335 = vst [vmem:[#allocation2 + $0x98] sm:$0xff] 0.0
          %336 = vst [vmem:[#allocation2 + $0xa0] sm:$0xff] 0.0
          %337 = vst [vmem:[#allocation2 + $0xa8] sm:$0xff] 0.0
          %338 = vst [vmem:[#allocation2 + $0xb0] sm:$0xff] 0.0
          %339 = vst [vmem:[#allocation2 + $0xb8] sm:$0xff] 0.0
          %340 = vst [vmem:[#allocation2 + $0xc0] sm:$0xff] 0.0
          %341 = vst [vmem:[#allocation2 + $0xc8] sm:$0xff] 0.0
          %342 = vst [vmem:[#allocation2 + $0xd0] sm:$0xff] 0.0
          %343 = vst [vmem:[#allocation2 + $0xd8] sm:$0xff] 0.0
          %344 = vst [vmem:[#allocation2 + $0xe0] sm:$0xff] 0.0
          %345 = vst [vmem:[#allocation2 + $0xe8] sm:$0xff] 0.0
          %346 = vst [vmem:[#allocation2 + $0xf0] sm:$0xff] 0.0
          %347 = vst [vmem:[#allocation2 + $0xf8] sm:$0xff] 0.0
          %348 = vst [vmem:[#allocation2 + $0x100] sm:$0xff] 0.0
          %349 = vst [vmem:[#allocation2 + $0x108] sm:$0xff] 0.0
          %350 = vst [vmem:[#allocation2 + $0x110] sm:$0xff] 0.0
          %351 = vst [vmem:[#allocation2 + $0x118] sm:$0xff] 0.0
          %352 = vst [vmem:[#allocation2 + $0x120] sm:$0xff] 0.0
          %353 = vst [vmem:[#allocation2 + $0x128] sm:$0xff] 0.0
          %354 = vst [vmem:[#allocation2 + $0x130] sm:$0xff] 0.0
          %355 = vst [vmem:[#allocation2 + $0x138] sm:$0xff] 0.0
          %356 = vst [vmem:[#allocation2 + $0x140] sm:$0xff] 0.0
          %357 = vst [vmem:[#allocation2 + $0x148] sm:$0xff] 0.0
          %358 = vst [vmem:[#allocation2 + $0x150] sm:$0xff] 0.0
          %359 = vst [vmem:[#allocation2 + $0x158] sm:$0xff] 0.0
          %360 = vst [vmem:[#allocation2 + $0x160] sm:$0xff] 0.0
          %361 = vst [vmem:[#allocation2 + $0x168] sm:$0xff] 0.0
          %362 = vst [vmem:[#allocation2 + $0x170] sm:$0xff] 0.0
          %363 = vst [vmem:[#allocation2 + $0x178] sm:$0xff] 0.0
          %364 = vst [vmem:[#allocation2 + $0x180] sm:$0xff] 0.0
          %365 = vst [vmem:[#allocation2 + $0x188] sm:$0xff] 0.0
          %366 = vst [vmem:[#allocation2 + $0x190] sm:$0xff] 0.0
          %367 = vst [vmem:[#allocation2 + $0x198] sm:$0xff] 0.0
          %368 = vst [vmem:[#allocation2 + $0x1a0] sm:$0xff] 0.0
          %369 = vst [vmem:[#allocation2 + $0x1a8] sm:$0xff] 0.0
          %370 = vst [vmem:[#allocation2 + $0x1b0] sm:$0xff] 0.0
          %371 = vst [vmem:[#allocation2 + $0x1b8] sm:$0xff] 0.0
          %372 = vst [vmem:[#allocation2 + $0x1c0] sm:$0xff] 0.0
          %373 = vst [vmem:[#allocation2 + $0x1c8] sm:$0xff] 0.0
          %374 = vst [vmem:[#allocation2 + $0x1d0] sm:$0xff] 0.0
          %375 = vst [vmem:[#allocation2 + $0x1d8] sm:$0xff] 0.0
          %376 = vst [vmem:[#allocation2 + $0x1e0] sm:$0xff] 0.0
          %377 = vst [vmem:[#allocation2 + $0x1e8] sm:$0xff] 0.0
          %378 = vst [vmem:[#allocation2 + $0x1f0] sm:$0xff] 0.0
          %379 = vst [vmem:[#allocation2 + $0x1f8] sm:$0xff] 0.0
        $region48: #{tpu_custom_call.1} parent=35 // pred_fallthru
          _
        %v380 = vld [vmem:[#allocation2] sm:$0xff]
        %v381 = vld [vmem:[#allocation2 + $0x8] sm:$0xff]
        %v382 = vld [vmem:[#allocation2 + $0x10] sm:$0xff]
        %v383 = vld [vmem:[#allocation2 + $0x18] sm:$0xff]
        %v384 = vld [vmem:[#allocation2 + $0x20] sm:$0xff]
        %v385 = vld [vmem:[#allocation2 + $0x28] sm:$0xff]
        %v386 = vld [vmem:[#allocation2 + $0x30] sm:$0xff]
        %v387 = vld [vmem:[#allocation2 + $0x38] sm:$0xff]
        %v388 = vld [vmem:[#allocation2 + $0x40] sm:$0xff]
        %v389 = vld [vmem:[#allocation2 + $0x48] sm:$0xff]
        %v390 = vld [vmem:[#allocation2 + $0x50] sm:$0xff]
        %v391 = vld [vmem:[#allocation2 + $0x58] sm:$0xff]
        %v392 = vld [vmem:[#allocation2 + $0x60] sm:$0xff]
        %v393 = vld [vmem:[#allocation2 + $0x68] sm:$0xff]
        %v394 = vld [vmem:[#allocation2 + $0x70] sm:$0xff]
        %v395 = vld [vmem:[#allocation2 + $0x78] sm:$0xff]
        %v396 = vld [vmem:[#allocation2 + $0x80] sm:$0xff]
        %v397 = vld [vmem:[#allocation2 + $0x88] sm:$0xff]
        %v398 = vld [vmem:[#allocation2 + $0x90] sm:$0xff]
        %v399 = vld [vmem:[#allocation2 + $0x98] sm:$0xff]
        %v400 = vld [vmem:[#allocation2 + $0xa0] sm:$0xff]
        %v401 = vld [vmem:[#allocation2 + $0xa8] sm:$0xff]
        %v402 = vld [vmem:[#allocation2 + $0xb0] sm:$0xff]
        %v403 = vld [vmem:[#allocation2 + $0xb8] sm:$0xff]
        %v404 = vld [vmem:[#allocation2 + $0xc0] sm:$0xff]
        %v405 = vld [vmem:[#allocation2 + $0xc8] sm:$0xff]
        %v406 = vld [vmem:[#allocation2 + $0xd0] sm:$0xff]
        %v407 = vld [vmem:[#allocation2 + $0xd8] sm:$0xff]
        %v408 = vld [vmem:[#allocation2 + $0xe0] sm:$0xff]
        %v409 = vld [vmem:[#allocation2 + $0xe8] sm:$0xff]
        %v410 = vld [vmem:[#allocation2 + $0xf0] sm:$0xff]
        %v411 = vld [vmem:[#allocation2 + $0xf8] sm:$0xff]
        %v412 = vld [vmem:[#allocation2 + $0x100] sm:$0xff]
        %v413 = vld [vmem:[#allocation2 + $0x108] sm:$0xff]
        %v414 = vld [vmem:[#allocation2 + $0x110] sm:$0xff]
        %v415 = vld [vmem:[#allocation2 + $0x118] sm:$0xff]
        %v416 = vld [vmem:[#allocation2 + $0x120] sm:$0xff]
        %v417 = vld [vmem:[#allocation2 + $0x128] sm:$0xff]
        %v418 = vld [vmem:[#allocation2 + $0x130] sm:$0xff]
        %v419 = vld [vmem:[#allocation2 + $0x138] sm:$0xff]
        %v420 = vld [vmem:[#allocation2 + $0x140] sm:$0xff]
        %v421 = vld [vmem:[#allocation2 + $0x148] sm:$0xff]
        %v422 = vld [vmem:[#allocation2 + $0x150] sm:$0xff]
        %v423 = vld [vmem:[#allocation2 + $0x158] sm:$0xff]
        %v424 = vld [vmem:[#allocation2 + $0x160] sm:$0xff]
        %v425 = vld [vmem:[#allocation2 + $0x168] sm:$0xff]
        %v426 = vld [vmem:[#allocation2 + $0x170] sm:$0xff]
        %v427 = vld [vmem:[#allocation2 + $0x178] sm:$0xff]
        %v428 = vld [vmem:[#allocation2 + $0x180] sm:$0xff]
        %v429 = vld [vmem:[#allocation2 + $0x188] sm:$0xff]
        %v430 = vld [vmem:[#allocation2 + $0x190] sm:$0xff]
        %v431 = vld [vmem:[#allocation2 + $0x198] sm:$0xff]
        %v432 = vld [vmem:[#allocation2 + $0x1a0] sm:$0xff]
        %v433 = vld [vmem:[#allocation2 + $0x1a8] sm:$0xff]
        %v434 = vld [vmem:[#allocation2 + $0x1b0] sm:$0xff]
        %v435 = vld [vmem:[#allocation2 + $0x1b8] sm:$0xff]
        %v436 = vld [vmem:[#allocation2 + $0x1c0] sm:$0xff]
        %v437 = vld [vmem:[#allocation2 + $0x1c8] sm:$0xff]
        %v438 = vld [vmem:[#allocation2 + $0x1d0] sm:$0xff]
        %v439 = vld [vmem:[#allocation2 + $0x1d8] sm:$0xff]
        %v440 = vld [vmem:[#allocation2 + $0x1e0] sm:$0xff]
        %v441 = vld [vmem:[#allocation2 + $0x1e8] sm:$0xff]
        %v442 = vld [vmem:[#allocation2 + $0x1f0] sm:$0xff]
        %v443 = vld [vmem:[#allocation2 + $0x1f8] sm:$0xff]
        %v444 = vld [vmem:[%s259] sm:$0xf]
        %v445 = vld [vmem:[%s259 + $0x4] sm:$0xf]
        %v446 = vld [vmem:[%s259 + $0x8] sm:$0xf]
        %v447 = vld [vmem:[%s259 + $0xc] sm:$0xf]
        %v448 = vld [vmem:[%s259 + $0x10] sm:$0xf]
        %v449 = vld [vmem:[%s259 + $0x14] sm:$0xf]
        %v450 = vld [vmem:[%s259 + $0x18] sm:$0xf]
        %v451 = vld [vmem:[%s259 + $0x1c] sm:$0xf]
        %v452 = vld [vmem:[%s259 + $0x20] sm:$0xf]
        %v453 = vld [vmem:[%s259 + $0x24] sm:$0xf]
        %v454 = vld [vmem:[%s259 + $0x28] sm:$0xf]
        %v455 = vld [vmem:[%s259 + $0x2c] sm:$0xf]
        %v456 = vld [vmem:[%s259 + $0x30] sm:$0xf]
        %v457 = vld [vmem:[%s259 + $0x34] sm:$0xf]
        %v458 = vld [vmem:[%s259 + $0x38] sm:$0xf]
        %v459 = vld [vmem:[%s259 + $0x3c] sm:$0xf]
        %v460 = vld [vmem:[%s259 + $0x40] sm:$0xf]
        %v461 = vld [vmem:[%s259 + $0x44] sm:$0xf]
        %v462 = vld [vmem:[%s259 + $0x48] sm:$0xf]
        %v463 = vld [vmem:[%s259 + $0x4c] sm:$0xf]
        %v464 = vld [vmem:[%s259 + $0x50] sm:$0xf]
        %v465 = vld [vmem:[%s259 + $0x54] sm:$0xf]
        %v466 = vld [vmem:[%s259 + $0x58] sm:$0xf]
        %v467 = vld [vmem:[%s259 + $0x5c] sm:$0xf]
        %v468 = vld [vmem:[%s259 + $0x60] sm:$0xf]
        %v469 = vld [vmem:[%s259 + $0x64] sm:$0xf]
        %v470 = vld [vmem:[%s259 + $0x68] sm:$0xf]
        %v471 = vld [vmem:[%s259 + $0x6c] sm:$0xf]
        %v472 = vld [vmem:[%s259 + $0x70] sm:$0xf]
        %v473 = vld [vmem:[%s259 + $0x74] sm:$0xf]
        %v474 = vld [vmem:[%s259 + $0x78] sm:$0xf]
        %v475 = vld [vmem:[%s259 + $0x7c] sm:$0xf]
        %v476 = vld [vmem:[#allocation6] sm:$0xff]
        %v477 = vld [vmem:[#allocation6 + $0x8] sm:$0xff]
        %v478 = vld [vmem:[#allocation6 + $0x10] sm:$0xff]
        %v479 = vld [vmem:[#allocation6 + $0x18] sm:$0xff]
        %v480 = vld [vmem:[#allocation6 + $0x20] sm:$0xff]
        %v481 = vld [vmem:[#allocation6 + $0x28] sm:$0xff]
        %v482 = vld [vmem:[#allocation6 + $0x30] sm:$0xff]
        %v483 = vld [vmem:[#allocation6 + $0x38] sm:$0xff]
        %v484 = vld [vmem:[#allocation6 + $0x40] sm:$0xff]
        %v485 = vld [vmem:[#allocation6 + $0x48] sm:$0xff]
        %v486 = vld [vmem:[#allocation6 + $0x50] sm:$0xff]
        %v487 = vld [vmem:[#allocation6 + $0x58] sm:$0xff]
        %v488 = vld [vmem:[#allocation6 + $0x60] sm:$0xff]
        %v489 = vld [vmem:[#allocation6 + $0x68] sm:$0xff]
        %v490 = vld [vmem:[#allocation6 + $0x70] sm:$0xff]
        %v491 = vld [vmem:[#allocation6 + $0x78] sm:$0xff]
        %v524 = vunpack.c.l.b16 %v444
        %v525 = vunpack.c.l.b16 %v445
        %v526 = vunpack.c.l.b16 %v446
        %v527 = vunpack.c.l.b16 %v447
        %v528 = vunpack.c.l.b16 %v448
        %v529 = vunpack.c.l.b16 %v449
        %v530 = vunpack.c.l.b16 %v450
        %v531 = vunpack.c.l.b16 %v451
        %v532 = vunpack.c.l.b16 %v452
        %v533 = vunpack.c.l.b16 %v453
        %v534 = vunpack.c.l.b16 %v454
        %v535 = vunpack.c.l.b16 %v455
        %v536 = vunpack.c.l.b16 %v456
        %v537 = vunpack.c.l.b16 %v457
        %v538 = vunpack.c.l.b16 %v458
        %v539 = vunpack.c.l.b16 %v459
        %v540 = vunpack.c.l.b16 %v460
        %v541 = vunpack.c.l.b16 %v461
        %v542 = vunpack.c.l.b16 %v462
        %v543 = vunpack.c.l.b16 %v463
        %v544 = vunpack.c.l.b16 %v464
        %v545 = vunpack.c.l.b16 %v465
        %v546 = vunpack.c.l.b16 %v466
        %v547 = vunpack.c.l.b16 %v467
        %v548 = vunpack.c.l.b16 %v468
        %v549 = vunpack.c.l.b16 %v469
        %v550 = vunpack.c.l.b16 %v470
        %v551 = vunpack.c.l.b16 %v471
        %v552 = vunpack.c.l.b16 %v472
        %v553 = vunpack.c.l.b16 %v473
        %v554 = vunpack.c.l.b16 %v474
        %v555 = vunpack.c.l.b16 %v475
        %v556 = vpack.c.b16 %v525, %v524
        %v557 = vpack.c.b16 %v527, %v526
        %v558 = vpack.c.b16 %v529, %v528
        %v559 = vpack.c.b16 %v531, %v530
        %v560 = vpack.c.b16 %v533, %v532
        %v561 = vpack.c.b16 %v535, %v534
        %v562 = vpack.c.b16 %v537, %v536
        %v563 = vpack.c.b16 %v539, %v538
        %v564 = vpack.c.b16 %v541, %v540
        %v565 = vpack.c.b16 %v543, %v542
        %v566 = vpack.c.b16 %v545, %v544
        %v567 = vpack.c.b16 %v547, %v546
        %v568 = vpack.c.b16 %v549, %v548
        %v569 = vpack.c.b16 %v551, %v550
        %v570 = vpack.c.b16 %v553, %v552
        %v571 = vpack.c.b16 %v555, %v554
        %v604 = vunpack.c.l.b16 %v476
        %v605 = vunpack.c.h.b16 %v476
        %v606 = vunpack.c.l.b16 %v477
        %v607 = vunpack.c.h.b16 %v477
        %v608 = vunpack.c.l.b16 %v478
        %v609 = vunpack.c.h.b16 %v478
        %v610 = vunpack.c.l.b16 %v479
        %v611 = vunpack.c.h.b16 %v479
        %v612 = vunpack.c.l.b16 %v480
        %v613 = vunpack.c.h.b16 %v480
        %v614 = vunpack.c.l.b16 %v481
        %v615 = vunpack.c.h.b16 %v481
        %v616 = vunpack.c.l.b16 %v482
        %v617 = vunpack.c.h.b16 %v482
        %v618 = vunpack.c.l.b16 %v483
        %v619 = vunpack.c.h.b16 %v483
        %v620 = vunpack.c.l.b16 %v484
        %v621 = vunpack.c.h.b16 %v484
        %v622 = vunpack.c.l.b16 %v485
        %v623 = vunpack.c.h.b16 %v485
        %v624 = vunpack.c.l.b16 %v486
        %v625 = vunpack.c.h.b16 %v486
        %v626 = vunpack.c.l.b16 %v487
        %v627 = vunpack.c.h.b16 %v487
        %v628 = vunpack.c.l.b16 %v488
        %v629 = vunpack.c.h.b16 %v488
        %v630 = vunpack.c.l.b16 %v489
        %v631 = vunpack.c.h.b16 %v489
        %v632 = vunpack.c.l.b16 %v490
        %v633 = vunpack.c.h.b16 %v490
        %v634 = vunpack.c.l.b16 %v491
        %v635 = vunpack.c.h.b16 %v491
        %v636 = vpack.c.b16 %v606, %v604
        %v637 = vpack.c.b16 %v607, %v605
        %v638 = vpack.c.b16 %v610, %v608
        %v639 = vpack.c.b16 %v611, %v609
        %v640 = vpack.c.b16 %v614, %v612
        %v641 = vpack.c.b16 %v615, %v613
        %v642 = vpack.c.b16 %v618, %v616
        %v643 = vpack.c.b16 %v619, %v617
        %v644 = vpack.c.b16 %v622, %v620
        %v645 = vpack.c.b16 %v623, %v621
        %v646 = vpack.c.b16 %v626, %v624
        %v647 = vpack.c.b16 %v627, %v625
        %v648 = vpack.c.b16 %v630, %v628
        %v649 = vpack.c.b16 %v631, %v629
        %v650 = vpack.c.b16 %v634, %v632
        %v651 = vpack.c.b16 %v635, %v633
        %668 = vmatprep.subr.bf16.mxu0 %v651
        %669 = vmatpush1.bf16.msra.mxu0 %v650
        %670 = vmatprep.subr.bf16.mxu0 %v649
        %671 = vmatpush1.bf16.msra.mxu0 %v648
        %672 = vmatprep.subr.bf16.mxu0 %v647
        %673 = vmatpush1.bf16.msra.mxu0 %v646
        %674 = vmatprep.subr.bf16.mxu0 %v645
        %675 = vmatpush1.bf16.msra.mxu0 %v644
        %676 = vmatprep.subr.bf16.mxu0 %v643
        %677 = vmatpush1.bf16.msra.mxu0 %v642
        %678 = vmatprep.subr.bf16.mxu0 %v641
        %679 = vmatpush1.bf16.msra.mxu0 %v640
        %680 = vmatprep.subr.bf16.mxu0 %v639
        %681 = vmatpush1.bf16.msra.mxu0 %v638
        %682 = vmatprep.subr.bf16.mxu0 %v637
        %683 = vmatpush1.bf16.msra.mxu0 %v636
        %684 = vmatprep.subr.bf16.mxu0 0
        %685 = vmatpush2.bf16.msra.mxu0 0
        %686 = vmatprep.subr.bf16.mxu0 0
        %687 = vmatpush2.bf16.msra.mxu0 0
        %688 = vmatprep.subr.bf16.mxu0 0
        %689 = vmatpush2.bf16.msra.mxu0 0
        %690 = vmatprep.subr.bf16.mxu0 0
        %691 = vmatpush2.bf16.msra.mxu0 0
        %692 = vmatprep.subr.bf16.mxu0 0
        %693 = vmatpush2.bf16.msra.mxu0 0
        %694 = vmatprep.subr.bf16.mxu0 0
        %695 = vmatpush2.bf16.msra.mxu0 0
        %696 = vmatprep.subr.bf16.mxu0 0
        %697 = vmatpush2.bf16.msra.mxu0 0
        %698 = vmatprep.subr.bf16.mxu0 0
        %699 = vmatpush2.bf16.msra.mxu0 0
        %700 = vmatprep.mubr.bf16.mxu0 0
        %701 = vmatmul.mubr.bf16.gmra.mxu0 %v556
        %v702 = vpop.f32.mrf.mxu0
        %v703 = vadd.f32 0.0, %v702
        %v704 = vpop.f32.mrf.mxu0
        %v705 = vadd.f32 0.0, %v704
        %v706 = vpop.f32.mrf.mxu0
        %v707 = vadd.f32 0.0, %v706
        %v708 = vpop.f32.mrf.mxu0
        %v709 = vadd.f32 0.0, %v708
        %710 = vmatprep.mubr.bf16.mxu0 0
        %711 = vmatmul.mubr.bf16.gmra.mxu0 %v557
        %v712 = vpop.f32.mrf.mxu0
        %v713 = vadd.f32 0.0, %v712
        %v714 = vpop.f32.mrf.mxu0
        %v715 = vadd.f32 0.0, %v714
        %v716 = vpop.f32.mrf.mxu0
        %v717 = vadd.f32 0.0, %v716
        %v718 = vpop.f32.mrf.mxu0
        %v719 = vadd.f32 0.0, %v718
        %720 = vmatprep.mubr.bf16.mxu0 0
        %721 = vmatmul.mubr.bf16.gmra.mxu0 %v558
        %v722 = vpop.f32.mrf.mxu0
        %v723 = vadd.f32 0.0, %v722
        %v724 = vpop.f32.mrf.mxu0
        %v725 = vadd.f32 0.0, %v724
        %v726 = vpop.f32.mrf.mxu0
        %v727 = vadd.f32 0.0, %v726
        %v728 = vpop.f32.mrf.mxu0
        %v729 = vadd.f32 0.0, %v728
        %730 = vmatprep.mubr.bf16.mxu0 0
        %731 = vmatmul.mubr.bf16.gmra.mxu0 %v559
        %v732 = vpop.f32.mrf.mxu0
        %v733 = vadd.f32 0.0, %v732
        %v734 = vpop.f32.mrf.mxu0
        %v735 = vadd.f32 0.0, %v734
        %v736 = vpop.f32.mrf.mxu0
        %v737 = vadd.f32 0.0, %v736
        %v738 = vpop.f32.mrf.mxu0
        %v739 = vadd.f32 0.0, %v738
        %740 = vmatprep.mubr.bf16.mxu0 0
        %741 = vmatmul.mubr.bf16.gmra.mxu0 %v560
        %v742 = vpop.f32.mrf.mxu0
        %v743 = vadd.f32 0.0, %v742
        %v744 = vpop.f32.mrf.mxu0
        %v745 = vadd.f32 0.0, %v744
        %v746 = vpop.f32.mrf.mxu0
        %v747 = vadd.f32 0.0, %v746
        %v748 = vpop.f32.mrf.mxu0
        %v749 = vadd.f32 0.0, %v748
        %750 = vmatprep.mubr.bf16.mxu0 0
        %751 = vmatmul.mubr.bf16.gmra.mxu0 %v561
        %v752 = vpop.f32.mrf.mxu0
        %v753 = vadd.f32 0.0, %v752
        %v754 = vpop.f32.mrf.mxu0
        %v755 = vadd.f32 0.0, %v754
        %v756 = vpop.f32.mrf.mxu0
        %v757 = vadd.f32 0.0, %v756
        %v758 = vpop.f32.mrf.mxu0
        %v759 = vadd.f32 0.0, %v758
        %760 = vmatprep.mubr.bf16.mxu0 0
        %761 = vmatmul.mubr.bf16.gmra.mxu0 %v562
        %v762 = vpop.f32.mrf.mxu0
        %v763 = vadd.f32 0.0, %v762
        %v764 = vpop.f32.mrf.mxu0
        %v765 = vadd.f32 0.0, %v764
        %v766 = vpop.f32.mrf.mxu0
        %v767 = vadd.f32 0.0, %v766
        %v768 = vpop.f32.mrf.mxu0
        %v769 = vadd.f32 0.0, %v768
        %770 = vmatprep.mubr.bf16.mxu0 0
        %771 = vmatmul.mubr.bf16.gmra.mxu0 %v563
        %v772 = vpop.f32.mrf.mxu0
        %v773 = vadd.f32 0.0, %v772
        %v774 = vpop.f32.mrf.mxu0
        %v775 = vadd.f32 0.0, %v774
        %v776 = vpop.f32.mrf.mxu0
        %v777 = vadd.f32 0.0, %v776
        %v778 = vpop.f32.mrf.mxu0
        %v779 = vadd.f32 0.0, %v778
        %780 = vmatprep.mubr.bf16.mxu0 0
        %781 = vmatmul.mubr.bf16.gmra.mxu0 %v564
        %v782 = vpop.f32.mrf.mxu0
        %v783 = vadd.f32 0.0, %v782
        %v784 = vpop.f32.mrf.mxu0
        %v785 = vadd.f32 0.0, %v784
        %v786 = vpop.f32.mrf.mxu0
        %v787 = vadd.f32 0.0, %v786
        %v788 = vpop.f32.mrf.mxu0
        %v789 = vadd.f32 0.0, %v788
        %790 = vmatprep.mubr.bf16.mxu0 0
        %791 = vmatmul.mubr.bf16.gmra.mxu0 %v565
        %v792 = vpop.f32.mrf.mxu0
        %v793 = vadd.f32 0.0, %v792
        %v794 = vpop.f32.mrf.mxu0
        %v795 = vadd.f32 0.0, %v794
        %v796 = vpop.f32.mrf.mxu0
        %v797 = vadd.f32 0.0, %v796
        %v798 = vpop.f32.mrf.mxu0
        %v799 = vadd.f32 0.0, %v798
        %800 = vmatprep.mubr.bf16.mxu0 0
        %801 = vmatmul.mubr.bf16.gmra.mxu0 %v566
        %v802 = vpop.f32.mrf.mxu0
        %v803 = vadd.f32 0.0, %v802
        %v804 = vpop.f32.mrf.mxu0
        %v805 = vadd.f32 0.0, %v804
        %v806 = vpop.f32.mrf.mxu0
        %v807 = vadd.f32 0.0, %v806
        %v808 = vpop.f32.mrf.mxu0
        %v809 = vadd.f32 0.0, %v808
        %810 = vmatprep.mubr.bf16.mxu0 0
        %811 = vmatmul.mubr.bf16.gmra.mxu0 %v567
        %v812 = vpop.f32.mrf.mxu0
        %v813 = vadd.f32 0.0, %v812
        %v814 = vpop.f32.mrf.mxu0
        %v815 = vadd.f32 0.0, %v814
        %v816 = vpop.f32.mrf.mxu0
        %v817 = vadd.f32 0.0, %v816
        %v818 = vpop.f32.mrf.mxu0
        %v819 = vadd.f32 0.0, %v818
        %820 = vmatprep.mubr.bf16.mxu0 0
        %821 = vmatmul.mubr.bf16.gmra.mxu0 %v568
        %v822 = vpop.f32.mrf.mxu0
        %v823 = vadd.f32 0.0, %v822
        %v824 = vpop.f32.mrf.mxu0
        %v825 = vadd.f32 0.0, %v824
        %v826 = vpop.f32.mrf.mxu0
        %v827 = vadd.f32 0.0, %v826
        %v828 = vpop.f32.mrf.mxu0
        %v829 = vadd.f32 0.0, %v828
        %830 = vmatprep.mubr.bf16.mxu0 0
        %831 = vmatmul.mubr.bf16.gmra.mxu0 %v569
        %v832 = vpop.f32.mrf.mxu0
        %v833 = vadd.f32 0.0, %v832
        %v834 = vpop.f32.mrf.mxu0
        %v835 = vadd.f32 0.0, %v834
        %v836 = vpop.f32.mrf.mxu0
        %v837 = vadd.f32 0.0, %v836
        %v838 = vpop.f32.mrf.mxu0
        %v839 = vadd.f32 0.0, %v838
        %840 = vmatprep.mubr.bf16.mxu0 0
        %841 = vmatmul.mubr.bf16.gmra.mxu0 %v570
        %v842 = vpop.f32.mrf.mxu0
        %v843 = vadd.f32 0.0, %v842
        %v844 = vpop.f32.mrf.mxu0
        %v845 = vadd.f32 0.0, %v844
        %v846 = vpop.f32.mrf.mxu0
        %v847 = vadd.f32 0.0, %v846
        %v848 = vpop.f32.mrf.mxu0
        %v849 = vadd.f32 0.0, %v848
        %850 = vmatprep.mubr.bf16.mxu0 0
        %851 = vmatmul.mubr.bf16.gmra.mxu0 %v571
        %v852 = vpop.f32.mrf.mxu0
        %v853 = vadd.f32 0.0, %v852
        %v854 = vpop.f32.mrf.mxu0
        %v855 = vadd.f32 0.0, %v854
        %v856 = vpop.f32.mrf.mxu0
        %v857 = vadd.f32 0.0, %v856
        %v858 = vpop.f32.mrf.mxu0
        %v859 = vadd.f32 0.0, %v858
        %860 = vdwg.mxu0
        %v861 = vadd.f32 %v380, %v703
        %v862 = vadd.f32 %v381, %v705
        %v863 = vadd.f32 %v382, %v707
        %v864 = vadd.f32 %v383, %v709
        %v865 = vadd.f32 %v384, %v713
        %v866 = vadd.f32 %v385, %v715
        %v867 = vadd.f32 %v386, %v717
        %v868 = vadd.f32 %v387, %v719
        %v869 = vadd.f32 %v388, %v723
        %v870 = vadd.f32 %v389, %v725
        %v871 = vadd.f32 %v390, %v727
        %v872 = vadd.f32 %v391, %v729
        %v873 = vadd.f32 %v392, %v733
        %v874 = vadd.f32 %v393, %v735
        %v875 = vadd.f32 %v394, %v737
        %v876 = vadd.f32 %v395, %v739
        %v877 = vadd.f32 %v396, %v743
        %v878 = vadd.f32 %v397, %v745
        %v879 = vadd.f32 %v398, %v747
        %v880 = vadd.f32 %v399, %v749
        %v881 = vadd.f32 %v400, %v753
        %v882 = vadd.f32 %v401, %v755
        %v883 = vadd.f32 %v402, %v757
        %v884 = vadd.f32 %v403, %v759
        %v885 = vadd.f32 %v404, %v763
        %v886 = vadd.f32 %v405, %v765
        %v887 = vadd.f32 %v406, %v767
        %v888 = vadd.f32 %v407, %v769
        %v889 = vadd.f32 %v408, %v773
        %v890 = vadd.f32 %v409, %v775
        %v891 = vadd.f32 %v410, %v777
        %v892 = vadd.f32 %v411, %v779
        %v893 = vadd.f32 %v412, %v783
        %v894 = vadd.f32 %v413, %v785
        %v895 = vadd.f32 %v414, %v787
        %v896 = vadd.f32 %v415, %v789
        %v897 = vadd.f32 %v416, %v793
        %v898 = vadd.f32 %v417, %v795
        %v899 = vadd.f32 %v418, %v797
        %v900 = vadd.f32 %v419, %v799
        %v901 = vadd.f32 %v420, %v803
        %v902 = vadd.f32 %v421, %v805
        %v903 = vadd.f32 %v422, %v807
        %v904 = vadd.f32 %v423, %v809
        %v905 = vadd.f32 %v424, %v813
        %v906 = vadd.f32 %v425, %v815
        %v907 = vadd.f32 %v426, %v817
        %v908 = vadd.f32 %v427, %v819
        %v909 = vadd.f32 %v428, %v823
        %v910 = vadd.f32 %v429, %v825
        %v911 = vadd.f32 %v430, %v827
        %v912 = vadd.f32 %v431, %v829
        %v913 = vadd.f32 %v432, %v833
        %v914 = vadd.f32 %v433, %v835
        %v915 = vadd.f32 %v434, %v837
        %v916 = vadd.f32 %v435, %v839
        %v917 = vadd.f32 %v436, %v843
        %v918 = vadd.f32 %v437, %v845
        %v919 = vadd.f32 %v438, %v847
        %v920 = vadd.f32 %v439, %v849
        %v921 = vadd.f32 %v440, %v853
        %v922 = vadd.f32 %v441, %v855
        %v923 = vadd.f32 %v442, %v857
        %v924 = vadd.f32 %v443, %v859
        %925 = vst [vmem:[#allocation2] sm:$0xff] %v861
        %926 = vst [vmem:[#allocation2 + $0x8] sm:$0xff] %v862
        %927 = vst [vmem:[#allocation2 + $0x10] sm:$0xff] %v863
        %928 = vst [vmem:[#allocation2 + $0x18] sm:$0xff] %v864
        %929 = vst [vmem:[#allocation2 + $0x20] sm:$0xff] %v865
        %930 = vst [vmem:[#allocation2 + $0x28] sm:$0xff] %v866
        %931 = vst [vmem:[#allocation2 + $0x30] sm:$0xff] %v867
        %932 = vst [vmem:[#allocation2 + $0x38] sm:$0xff] %v868
        %933 = vst [vmem:[#allocation2 + $0x40] sm:$0xff] %v869
        %934 = vst [vmem:[#allocation2 + $0x48] sm:$0xff] %v870
        %935 = vst [vmem:[#allocation2 + $0x50] sm:$0xff] %v871
        %936 = vst [vmem:[#allocation2 + $0x58] sm:$0xff] %v872
        %937 = vst [vmem:[#allocation2 + $0x60] sm:$0xff] %v873
        %938 = vst [vmem:[#allocation2 + $0x68] sm:$0xff] %v874
        %939 = vst [vmem:[#allocation2 + $0x70] sm:$0xff] %v875
        %940 = vst [vmem:[#allocation2 + $0x78] sm:$0xff] %v876
        %941 = vst [vmem:[#allocation2 + $0x80] sm:$0xff] %v877
        %942 = vst [vmem:[#allocation2 + $0x88] sm:$0xff] %v878
        %943 = vst [vmem:[#allocation2 + $0x90] sm:$0xff] %v879
        %944 = vst [vmem:[#allocation2 + $0x98] sm:$0xff] %v880
        %945 = vst [vmem:[#allocation2 + $0xa0] sm:$0xff] %v881
        %946 = vst [vmem:[#allocation2 + $0xa8] sm:$0xff] %v882
        %947 = vst [vmem:[#allocation2 + $0xb0] sm:$0xff] %v883
        %948 = vst [vmem:[#allocation2 + $0xb8] sm:$0xff] %v884
        %949 = vst [vmem:[#allocation2 + $0xc0] sm:$0xff] %v885
        %950 = vst [vmem:[#allocation2 + $0xc8] sm:$0xff] %v886
        %951 = vst [vmem:[#allocation2 + $0xd0] sm:$0xff] %v887
        %952 = vst [vmem:[#allocation2 + $0xd8] sm:$0xff] %v888
        %953 = vst [vmem:[#allocation2 + $0xe0] sm:$0xff] %v889
        %954 = vst [vmem:[#allocation2 + $0xe8] sm:$0xff] %v890
        %955 = vst [vmem:[#allocation2 + $0xf0] sm:$0xff] %v891
        %956 = vst [vmem:[#allocation2 + $0xf8] sm:$0xff] %v892
        %957 = vst [vmem:[#allocation2 + $0x100] sm:$0xff] %v893
        %958 = vst [vmem:[#allocation2 + $0x108] sm:$0xff] %v894
        %959 = vst [vmem:[#allocation2 + $0x110] sm:$0xff] %v895
        %960 = vst [vmem:[#allocation2 + $0x118] sm:$0xff] %v896
        %961 = vst [vmem:[#allocation2 + $0x120] sm:$0xff] %v897
        %962 = vst [vmem:[#allocation2 + $0x128] sm:$0xff] %v898
        %963 = vst [vmem:[#allocation2 + $0x130] sm:$0xff] %v899
        %964 = vst [vmem:[#allocation2 + $0x138] sm:$0xff] %v900
        %965 = vst [vmem:[#allocation2 + $0x140] sm:$0xff] %v901
        %966 = vst [vmem:[#allocation2 + $0x148] sm:$0xff] %v902
        %967 = vst [vmem:[#allocation2 + $0x150] sm:$0xff] %v903
        %968 = vst [vmem:[#allocation2 + $0x158] sm:$0xff] %v904
        %969 = vst [vmem:[#allocation2 + $0x160] sm:$0xff] %v905
        %970 = vst [vmem:[#allocation2 + $0x168] sm:$0xff] %v906
        %971 = vst [vmem:[#allocation2 + $0x170] sm:$0xff] %v907
        %972 = vst [vmem:[#allocation2 + $0x178] sm:$0xff] %v908
        %973 = vst [vmem:[#allocation2 + $0x180] sm:$0xff] %v909
        %974 = vst [vmem:[#allocation2 + $0x188] sm:$0xff] %v910
        %975 = vst [vmem:[#allocation2 + $0x190] sm:$0xff] %v911
        %976 = vst [vmem:[#allocation2 + $0x198] sm:$0xff] %v912
        %977 = vst [vmem:[#allocation2 + $0x1a0] sm:$0xff] %v913
        %978 = vst [vmem:[#allocation2 + $0x1a8] sm:$0xff] %v914
        %979 = vst [vmem:[#allocation2 + $0x1b0] sm:$0xff] %v915
        %980 = vst [vmem:[#allocation2 + $0x1b8] sm:$0xff] %v916
        %981 = vst [vmem:[#allocation2 + $0x1c0] sm:$0xff] %v917
        %982 = vst [vmem:[#allocation2 + $0x1c8] sm:$0xff] %v918
        %983 = vst [vmem:[#allocation2 + $0x1d0] sm:$0xff] %v919
        %984 = vst [vmem:[#allocation2 + $0x1d8] sm:$0xff] %v920
        %985 = vst [vmem:[#allocation2 + $0x1e0] sm:$0xff] %v921
        %986 = vst [vmem:[#allocation2 + $0x1e8] sm:$0xff] %v922
        %987 = vst [vmem:[#allocation2 + $0x1f0] sm:$0xff] %v923
        %988 = vst [vmem:[#allocation2 + $0x1f8] sm:$0xff] %v924
        // Predicated region
        $region49: #{tpu_custom_call.1} parent=35 // pred_check
          %p989 = pneg %p312
        $region50: #{tpu_custom_call.1} parent=35 // pred_check_branch
          %991 = sbr.rel (%p989) target = $region52
        $region51: #{tpu_custom_call.1} parent=35 // pred_region
          %v992 = vld [vmem:[#allocation2] sm:$0xff]
          %v993 = vld [vmem:[#allocation2 + $0x8] sm:$0xff]
          %v994 = vld [vmem:[#allocation2 + $0x10] sm:$0xff]
          %v995 = vld [vmem:[#allocation2 + $0x18] sm:$0xff]
          %v996 = vld [vmem:[#allocation2 + $0x20] sm:$0xff]
          %v997 = vld [vmem:[#allocation2 + $0x28] sm:$0xff]
          %v998 = vld [vmem:[#allocation2 + $0x30] sm:$0xff]
          %v999 = vld [vmem:[#allocation2 + $0x38] sm:$0xff]
          %v1000 = vld [vmem:[#allocation2 + $0x40] sm:$0xff]
          %v1001 = vld [vmem:[#allocation2 + $0x48] sm:$0xff]
          %v1002 = vld [vmem:[#allocation2 + $0x50] sm:$0xff]
          %v1003 = vld [vmem:[#allocation2 + $0x58] sm:$0xff]
          %v1004 = vld [vmem:[#allocation2 + $0x60] sm:$0xff]
          %v1005 = vld [vmem:[#allocation2 + $0x68] sm:$0xff]
          %v1006 = vld [vmem:[#allocation2 + $0x70] sm:$0xff]
          %v1007 = vld [vmem:[#allocation2 + $0x78] sm:$0xff]
          %v1008 = vld [vmem:[#allocation2 + $0x80] sm:$0xff]
          %v1009 = vld [vmem:[#allocation2 + $0x88] sm:$0xff]
          %v1010 = vld [vmem:[#allocation2 + $0x90] sm:$0xff]
          %v1011 = vld [vmem:[#allocation2 + $0x98] sm:$0xff]
          %v1012 = vld [vmem:[#allocation2 + $0xa0] sm:$0xff]
          %v1013 = vld [vmem:[#allocation2 + $0xa8] sm:$0xff]
          %v1014 = vld [vmem:[#allocation2 + $0xb0] sm:$0xff]
          %v1015 = vld [vmem:[#allocation2 + $0xb8] sm:$0xff]
          %v1016 = vld [vmem:[#allocation2 + $0xc0] sm:$0xff]
          %v1017 = vld [vmem:[#allocation2 + $0xc8] sm:$0xff]
          %v1018 = vld [vmem:[#allocation2 + $0xd0] sm:$0xff]
          %v1019 = vld [vmem:[#allocation2 + $0xd8] sm:$0xff]
          %v1020 = vld [vmem:[#allocation2 + $0xe0] sm:$0xff]
          %v1021 = vld [vmem:[#allocation2 + $0xe8] sm:$0xff]
          %v1022 = vld [vmem:[#allocation2 + $0xf0] sm:$0xff]
          %v1023 = vld [vmem:[#allocation2 + $0xf8] sm:$0xff]
          %v1024 = vld [vmem:[#allocation2 + $0x100] sm:$0xff]
          %v1025 = vld [vmem:[#allocation2 + $0x108] sm:$0xff]
          %v1026 = vld [vmem:[#allocation2 + $0x110] sm:$0xff]
          %v1027 = vld [vmem:[#allocation2 + $0x118] sm:$0xff]
          %v1028 = vld [vmem:[#allocation2 + $0x120] sm:$0xff]
          %v1029 = vld [vmem:[#allocation2 + $0x128] sm:$0xff]
          %v1030 = vld [vmem:[#allocation2 + $0x130] sm:$0xff]
          %v1031 = vld [vmem:[#allocation2 + $0x138] sm:$0xff]
          %v1032 = vld [vmem:[#allocation2 + $0x140] sm:$0xff]
          %v1033 = vld [vmem:[#allocation2 + $0x148] sm:$0xff]
          %v1034 = vld [vmem:[#allocation2 + $0x150] sm:$0xff]
          %v1035 = vld [vmem:[#allocation2 + $0x158] sm:$0xff]
          %v1036 = vld [vmem:[#allocation2 + $0x160] sm:$0xff]
          %v1037 = vld [vmem:[#allocation2 + $0x168] sm:$0xff]
          %v1038 = vld [vmem:[#allocation2 + $0x170] sm:$0xff]
          %v1039 = vld [vmem:[#allocation2 + $0x178] sm:$0xff]
          %v1040 = vld [vmem:[#allocation2 + $0x180] sm:$0xff]
          %v1041 = vld [vmem:[#allocation2 + $0x188] sm:$0xff]
          %v1042 = vld [vmem:[#allocation2 + $0x190] sm:$0xff]
          %v1043 = vld [vmem:[#allocation2 + $0x198] sm:$0xff]
          %v1044 = vld [vmem:[#allocation2 + $0x1a0] sm:$0xff]
          %v1045 = vld [vmem:[#allocation2 + $0x1a8] sm:$0xff]
          %v1046 = vld [vmem:[#allocation2 + $0x1b0] sm:$0xff]
          %v1047 = vld [vmem:[#allocation2 + $0x1b8] sm:$0xff]
          %v1048 = vld [vmem:[#allocation2 + $0x1c0] sm:$0xff]
          %v1049 = vld [vmem:[#allocation2 + $0x1c8] sm:$0xff]
          %v1050 = vld [vmem:[#allocation2 + $0x1d0] sm:$0xff]
          %v1051 = vld [vmem:[#allocation2 + $0x1d8] sm:$0xff]
          %v1052 = vld [vmem:[#allocation2 + $0x1e0] sm:$0xff]
          %v1053 = vld [vmem:[#allocation2 + $0x1e8] sm:$0xff]
          %v1054 = vld [vmem:[#allocation2 + $0x1f0] sm:$0xff]
          %v1055 = vld [vmem:[#allocation2 + $0x1f8] sm:$0xff]
          %v1056 = vld [vmem:[%s302] sm:$0x3]
          %v1058 = vlaneseq
          %v1059 = vshrl.u32 %v1058, 7
          %v1060 = vsub.s32 0, %v1059
          %v1061 = vrot.slane %v1056, %v1060
          %v1062 = vlaneseq
          %v1063 = vshrl.u32 %v1062, 7
          %v1064 = vsub.s32 1, %v1063
          %v1065 = vrot.slane %v1056, %v1064
          %v1068 = vmul.f32 %v992, %v1061
          %v1069 = vmul.f32 %v993, %v1065
          %v1070 = vmul.f32 %v994, %v1061
          %v1071 = vmul.f32 %v995, %v1065
          %v1072 = vmul.f32 %v996, %v1061
          %v1073 = vmul.f32 %v997, %v1065
          %v1074 = vmul.f32 %v998, %v1061
          %v1075 = vmul.f32 %v999, %v1065
          %v1076 = vmul.f32 %v1000, %v1061
          %v1077 = vmul.f32 %v1001, %v1065
          %v1078 = vmul.f32 %v1002, %v1061
          %v1079 = vmul.f32 %v1003, %v1065
          %v1080 = vmul.f32 %v1004, %v1061
          %v1081 = vmul.f32 %v1005, %v1065
          %v1082 = vmul.f32 %v1006, %v1061
          %v1083 = vmul.f32 %v1007, %v1065
          %v1084 = vmul.f32 %v1008, %v1061
          %v1085 = vmul.f32 %v1009, %v1065
          %v1086 = vmul.f32 %v1010, %v1061
          %v1087 = vmul.f32 %v1011, %v1065
          %v1088 = vmul.f32 %v1012, %v1061
          %v1089 = vmul.f32 %v1013, %v1065
          %v1090 = vmul.f32 %v1014, %v1061
          %v1091 = vmul.f32 %v1015, %v1065
          %v1092 = vmul.f32 %v1016, %v1061
          %v1093 = vmul.f32 %v1017, %v1065
          %v1094 = vmul.f32 %v1018, %v1061
          %v1095 = vmul.f32 %v1019, %v1065
          %v1096 = vmul.f32 %v1020, %v1061
          %v1097 = vmul.f32 %v1021, %v1065
          %v1098 = vmul.f32 %v1022, %v1061
          %v1099 = vmul.f32 %v1023, %v1065
          %v1100 = vmul.f32 %v1024, %v1061
          %v1101 = vmul.f32 %v1025, %v1065
          %v1102 = vmul.f32 %v1026, %v1061
          %v1103 = vmul.f32 %v1027, %v1065
          %v1104 = vmul.f32 %v1028, %v1061
          %v1105 = vmul.f32 %v1029, %v1065
          %v1106 = vmul.f32 %v1030, %v1061
          %v1107 = vmul.f32 %v1031, %v1065
          %v1108 = vmul.f32 %v1032, %v1061
          %v1109 = vmul.f32 %v1033, %v1065
          %v1110 = vmul.f32 %v1034, %v1061
          %v1111 = vmul.f32 %v1035, %v1065
          %v1112 = vmul.f32 %v1036, %v1061
          %v1113 = vmul.f32 %v1037, %v1065
          %v1114 = vmul.f32 %v1038, %v1061
          %v1115 = vmul.f32 %v1039, %v1065
          %v1116 = vmul.f32 %v1040, %v1061
          %v1117 = vmul.f32 %v1041, %v1065
          %v1118 = vmul.f32 %v1042, %v1061
          %v1119 = vmul.f32 %v1043, %v1065
          %v1120 = vmul.f32 %v1044, %v1061
          %v1121 = vmul.f32 %v1045, %v1065
          %v1122 = vmul.f32 %v1046, %v1061
          %v1123 = vmul.f32 %v1047, %v1065
          %v1124 = vmul.f32 %v1048, %v1061
          %v1125 = vmul.f32 %v1049, %v1065
          %v1126 = vmul.f32 %v1050, %v1061
          %v1127 = vmul.f32 %v1051, %v1065
          %v1128 = vmul.f32 %v1052, %v1061
          %v1129 = vmul.f32 %v1053, %v1065
          %v1130 = vmul.f32 %v1054, %v1061
          %v1131 = vmul.f32 %v1055, %v1065
          %v1132 = vld [vmem:[%s307] sm:$0x3]
          %v1134 = vlaneseq
          %v1135 = vshrl.u32 %v1134, 7
          %v1136 = vsub.s32 0, %v1135
          %v1137 = vrot.slane %v1132, %v1136
          %v1138 = vlaneseq
          %v1139 = vshrl.u32 %v1138, 7
          %v1140 = vsub.s32 1, %v1139
          %v1141 = vrot.slane %v1132, %v1140
          %v1144 = vadd.f32 %v1068, %v1137
          %v1145 = vadd.f32 %v1069, %v1141
          %v1146 = vadd.f32 %v1070, %v1137
          %v1147 = vadd.f32 %v1071, %v1141
          %v1148 = vadd.f32 %v1072, %v1137
          %v1149 = vadd.f32 %v1073, %v1141
          %v1150 = vadd.f32 %v1074, %v1137
          %v1151 = vadd.f32 %v1075, %v1141
          %v1152 = vadd.f32 %v1076, %v1137
          %v1153 = vadd.f32 %v1077, %v1141
          %v1154 = vadd.f32 %v1078, %v1137
          %v1155 = vadd.f32 %v1079, %v1141
          %v1156 = vadd.f32 %v1080, %v1137
          %v1157 = vadd.f32 %v1081, %v1141
          %v1158 = vadd.f32 %v1082, %v1137
          %v1159 = vadd.f32 %v1083, %v1141
          %v1160 = vadd.f32 %v1084, %v1137
          %v1161 = vadd.f32 %v1085, %v1141
          %v1162 = vadd.f32 %v1086, %v1137
          %v1163 = vadd.f32 %v1087, %v1141
          %v1164 = vadd.f32 %v1088, %v1137
          %v1165 = vadd.f32 %v1089, %v1141
          %v1166 = vadd.f32 %v1090, %v1137
          %v1167 = vadd.f32 %v1091, %v1141
          %v1168 = vadd.f32 %v1092, %v1137
          %v1169 = vadd.f32 %v1093, %v1141
          %v1170 = vadd.f32 %v1094, %v1137
          %v1171 = vadd.f32 %v1095, %v1141
          %v1172 = vadd.f32 %v1096, %v1137
          %v1173 = vadd.f32 %v1097, %v1141
          %v1174 = vadd.f32 %v1098, %v1137
          %v1175 = vadd.f32 %v1099, %v1141
          %v1176 = vadd.f32 %v1100, %v1137
          %v1177 = vadd.f32 %v1101, %v1141
          %v1178 = vadd.f32 %v1102, %v1137
          %v1179 = vadd.f32 %v1103, %v1141
          %v1180 = vadd.f32 %v1104, %v1137
          %v1181 = vadd.f32 %v1105, %v1141
          %v1182 = vadd.f32 %v1106, %v1137
          %v1183 = vadd.f32 %v1107, %v1141
          %v1184 = vadd.f32 %v1108, %v1137
          %v1185 = vadd.f32 %v1109, %v1141
          %v1186 = vadd.f32 %v1110, %v1137
          %v1187 = vadd.f32 %v1111, %v1141
          %v1188 = vadd.f32 %v1112, %v1137
          %v1189 = vadd.f32 %v1113, %v1141
          %v1190 = vadd.f32 %v1114, %v1137
          %v1191 = vadd.f32 %v1115, %v1141
          %v1192 = vadd.f32 %v1116, %v1137
          %v1193 = vadd.f32 %v1117, %v1141
          %v1194 = vadd.f32 %v1118, %v1137
          %v1195 = vadd.f32 %v1119, %v1141
          %v1196 = vadd.f32 %v1120, %v1137
          %v1197 = vadd.f32 %v1121, %v1141
          %v1198 = vadd.f32 %v1122, %v1137
          %v1199 = vadd.f32 %v1123, %v1141
          %v1200 = vadd.f32 %v1124, %v1137
          %v1201 = vadd.f32 %v1125, %v1141
          %v1202 = vadd.f32 %v1126, %v1137
          %v1203 = vadd.f32 %v1127, %v1141
          %v1204 = vadd.f32 %v1128, %v1137
          %v1205 = vadd.f32 %v1129, %v1141
          %v1206 = vadd.f32 %v1130, %v1137
          %v1207 = vadd.f32 %v1131, %v1141
          %v1208 = vmax.f32 %v1144, 0.0
          %v1209 = vmax.f32 %v1145, 0.0
          %v1210 = vmax.f32 %v1146, 0.0
          %v1211 = vmax.f32 %v1147, 0.0
          %v1212 = vmax.f32 %v1148, 0.0
          %v1213 = vmax.f32 %v1149, 0.0
          %v1214 = vmax.f32 %v1150, 0.0
          %v1215 = vmax.f32 %v1151, 0.0
          %v1216 = vmax.f32 %v1152, 0.0
          %v1217 = vmax.f32 %v1153, 0.0
          %v1218 = vmax.f32 %v1154, 0.0
          %v1219 = vmax.f32 %v1155, 0.0
          %v1220 = vmax.f32 %v1156, 0.0
          %v1221 = vmax.f32 %v1157, 0.0
          %v1222 = vmax.f32 %v1158, 0.0
          %v1223 = vmax.f32 %v1159, 0.0
          %v1224 = vmax.f32 %v1160, 0.0
          %v1225 = vmax.f32 %v1161, 0.0
          %v1226 = vmax.f32 %v1162, 0.0
          %v1227 = vmax.f32 %v1163, 0.0
          %v1228 = vmax.f32 %v1164, 0.0
          %v1229 = vmax.f32 %v1165, 0.0
          %v1230 = vmax.f32 %v1166, 0.0
          %v1231 = vmax.f32 %v1167, 0.0
          %v1232 = vmax.f32 %v1168, 0.0
          %v1233 = vmax.f32 %v1169, 0.0
          %v1234 = vmax.f32 %v1170, 0.0
          %v1235 = vmax.f32 %v1171, 0.0
          %v1236 = vmax.f32 %v1172, 0.0
          %v1237 = vmax.f32 %v1173, 0.0
          %v1238 = vmax.f32 %v1174, 0.0
          %v1239 = vmax.f32 %v1175, 0.0
          %v1240 = vmax.f32 %v1176, 0.0
          %v1241 = vmax.f32 %v1177, 0.0
          %v1242 = vmax.f32 %v1178, 0.0
          %v1243 = vmax.f32 %v1179, 0.0
          %v1244 = vmax.f32 %v1180, 0.0
          %v1245 = vmax.f32 %v1181, 0.0
          %v1246 = vmax.f32 %v1182, 0.0
          %v1247 = vmax.f32 %v1183, 0.0
          %v1248 = vmax.f32 %v1184, 0.0
          %v1249 = vmax.f32 %v1185, 0.0
          %v1250 = vmax.f32 %v1186, 0.0
          %v1251 = vmax.f32 %v1187, 0.0
          %v1252 = vmax.f32 %v1188, 0.0
          %v1253 = vmax.f32 %v1189, 0.0
          %v1254 = vmax.f32 %v1190, 0.0
          %v1255 = vmax.f32 %v1191, 0.0
          %v1256 = vmax.f32 %v1192, 0.0
          %v1257 = vmax.f32 %v1193, 0.0
          %v1258 = vmax.f32 %v1194, 0.0
          %v1259 = vmax.f32 %v1195, 0.0
          %v1260 = vmax.f32 %v1196, 0.0
          %v1261 = vmax.f32 %v1197, 0.0
          %v1262 = vmax.f32 %v1198, 0.0
          %v1263 = vmax.f32 %v1199, 0.0
          %v1264 = vmax.f32 %v1200, 0.0
          %v1265 = vmax.f32 %v1201, 0.0
          %v1266 = vmax.f32 %v1202, 0.0
          %v1267 = vmax.f32 %v1203, 0.0
          %v1268 = vmax.f32 %v1204, 0.0
          %v1269 = vmax.f32 %v1205, 0.0
          %v1270 = vmax.f32 %v1206, 0.0
          %v1271 = vmax.f32 %v1207, 0.0
          %1272 = vst [vmem:[%s295] sm:$0xff] %v1208
          %1273 = vst [vmem:[%s295 + $0x8] sm:$0xff] %v1209
          %1274 = vst [vmem:[%s295 + $0x10] sm:$0xff] %v1210
          %1275 = vst [vmem:[%s295 + $0x18] sm:$0xff] %v1211
          %1276 = vst [vmem:[%s295 + $0x20] sm:$0xff] %v1212
          %1277 = vst [vmem:[%s295 + $0x28] sm:$0xff] %v1213
          %1278 = vst [vmem:[%s295 + $0x30] sm:$0xff] %v1214
          %1279 = vst [vmem:[%s295 + $0x38] sm:$0xff] %v1215
          %1280 = vst [vmem:[%s295 + $0x40] sm:$0xff] %v1216
          %1281 = vst [vmem:[%s295 + $0x48] sm:$0xff] %v1217
          %1282 = vst [vmem:[%s295 + $0x50] sm:$0xff] %v1218
          %1283 = vst [vmem:[%s295 + $0x58] sm:$0xff] %v1219
          %1284 = vst [vmem:[%s295 + $0x60] sm:$0xff] %v1220
          %1285 = vst [vmem:[%s295 + $0x68] sm:$0xff] %v1221
          %1286 = vst [vmem:[%s295 + $0x70] sm:$0xff] %v1222
          %1287 = vst [vmem:[%s295 + $0x78] sm:$0xff] %v1223
          %1288 = vst [vmem:[%s295 + $0x80] sm:$0xff] %v1224
          %1289 = vst [vmem:[%s295 + $0x88] sm:$0xff] %v1225
          %1290 = vst [vmem:[%s295 + $0x90] sm:$0xff] %v1226
          %1291 = vst [vmem:[%s295 + $0x98] sm:$0xff] %v1227
          %1292 = vst [vmem:[%s295 + $0xa0] sm:$0xff] %v1228
          %1293 = vst [vmem:[%s295 + $0xa8] sm:$0xff] %v1229
          %1294 = vst [vmem:[%s295 + $0xb0] sm:$0xff] %v1230
          %1295 = vst [vmem:[%s295 + $0xb8] sm:$0xff] %v1231
          %1296 = vst [vmem:[%s295 + $0xc0] sm:$0xff] %v1232
          %1297 = vst [vmem:[%s295 + $0xc8] sm:$0xff] %v1233
          %1298 = vst [vmem:[%s295 + $0xd0] sm:$0xff] %v1234
          %1299 = vst [vmem:[%s295 + $0xd8] sm:$0xff] %v1235
          %1300 = vst [vmem:[%s295 + $0xe0] sm:$0xff] %v1236
          %1301 = vst [vmem:[%s295 + $0xe8] sm:$0xff] %v1237
          %1302 = vst [vmem:[%s295 + $0xf0] sm:$0xff] %v1238
          %1303 = vst [vmem:[%s295 + $0xf8] sm:$0xff] %v1239
          %1304 = vst [vmem:[%s295 + $0x100] sm:$0xff] %v1240
          %1305 = vst [vmem:[%s295 + $0x108] sm:$0xff] %v1241
          %1306 = vst [vmem:[%s295 + $0x110] sm:$0xff] %v1242
          %1307 = vst [vmem:[%s295 + $0x118] sm:$0xff] %v1243
          %1308 = vst [vmem:[%s295 + $0x120] sm:$0xff] %v1244
          %1309 = vst [vmem:[%s295 + $0x128] sm:$0xff] %v1245
          %1310 = vst [vmem:[%s295 + $0x130] sm:$0xff] %v1246
          %1311 = vst [vmem:[%s295 + $0x138] sm:$0xff] %v1247
          %1312 = vst [vmem:[%s295 + $0x140] sm:$0xff] %v1248
          %1313 = vst [vmem:[%s295 + $0x148] sm:$0xff] %v1249
          %1314 = vst [vmem:[%s295 + $0x150] sm:$0xff] %v1250
          %1315 = vst [vmem:[%s295 + $0x158] sm:$0xff] %v1251
          %1316 = vst [vmem:[%s295 + $0x160] sm:$0xff] %v1252
          %1317 = vst [vmem:[%s295 + $0x168] sm:$0xff] %v1253
          %1318 = vst [vmem:[%s295 + $0x170] sm:$0xff] %v1254
          %1319 = vst [vmem:[%s295 + $0x178] sm:$0xff] %v1255
          %1320 = vst [vmem:[%s295 + $0x180] sm:$0xff] %v1256
          %1321 = vst [vmem:[%s295 + $0x188] sm:$0xff] %v1257
          %1322 = vst [vmem:[%s295 + $0x190] sm:$0xff] %v1258
          %1323 = vst [vmem:[%s295 + $0x198] sm:$0xff] %v1259
          %1324 = vst [vmem:[%s295 + $0x1a0] sm:$0xff] %v1260
          %1325 = vst [vmem:[%s295 + $0x1a8] sm:$0xff] %v1261
          %1326 = vst [vmem:[%s295 + $0x1b0] sm:$0xff] %v1262
          %1327 = vst [vmem:[%s295 + $0x1b8] sm:$0xff] %v1263
          %1328 = vst [vmem:[%s295 + $0x1c0] sm:$0xff] %v1264
          %1329 = vst [vmem:[%s295 + $0x1c8] sm:$0xff] %v1265
          %1330 = vst [vmem:[%s295 + $0x1d0] sm:$0xff] %v1266
          %1331 = vst [vmem:[%s295 + $0x1d8] sm:$0xff] %v1267
          %1332 = vst [vmem:[%s295 + $0x1e0] sm:$0xff] %v1268
          %1333 = vst [vmem:[%s295 + $0x1e8] sm:$0xff] %v1269
          %1334 = vst [vmem:[%s295 + $0x1f0] sm:$0xff] %v1270
          %1335 = vst [vmem:[%s295 + $0x1f8] sm:$0xff] %v1271
        $region52: #{tpu_custom_call.1} parent=35 // pred_fallthru
          _
        %s1336 = sand.u32 %s159, 1
        %s1337 = scalar_lea.sflag [#allocation5], %s1336
        %s1338 = sand.u32 %s159, 1
        %s1339 = smul.addr %s1338, 512
        %s1340 = scalar_lea.vmem [#allocation8], %s1339
        // Predicated region
        $region53: #{tpu_custom_call.1} parent=35 // pred_check
          %p1341 = pneg %p169
        $region54: #{tpu_custom_call.1} parent=35 // pred_check_branch
          %1343 = sbr.rel (%p1341) target = $region56
        $region55: #{tpu_custom_call.1} parent=35 // pred_region
          %s1344 = smul.u32 32, %s27
          %s1345 = smul.u32 2, %s28
          %s1347 = ssub.s32 8192, 8192
          %1348 = vsyncadd %s1337, %s1347
          %s1349 = smul.addr %s1344, 2
          %s1350 = sadd.s32 %s1345, %s1349
          %s1351 = smul.addr %s1350, 128
          %s1352 = scalar_lea.hbm %s4, %s1351
          %s1353 = sshll.u32 %s1340, 4
          %s1354 = int_to_ptr.vmem [resolvable:$true] %s1353
          %1359 = dma.vmem_to_hbm [thread:$0]  %s1354, 8192, %s1352, %s1337, 256, 256, 16
        $region56: #{tpu_custom_call.1} parent=35 // pred_fallthru
          _
      $region36: #{tpu_custom_call.1} parent=5 // pred_fallthru
        _
      %p1360 = scmp.le.s32.totalorder 2, %s17
      // Predicated region
      $region57: #{tpu_custom_call.1} parent=5 // pred_check
        %p1361 = pneg %p1360
      $region58: #{tpu_custom_call.1} parent=5 // pred_check_branch
        %1363 = sbr.rel (%p1361) target = $region60
      $region59: #{tpu_custom_call.1} parent=5 // pred_region
        %s1364 = ssub.s32 %s17, 2
        // Predicated region
        $region61: #{tpu_custom_call.1} parent=59 // pred_check
          %p1365 = pneg %p175
        $region62: #{tpu_custom_call.1} parent=59 // pred_check_branch
          %1367 = sbr.rel (%p1365) target = $region64
        $region63: #{tpu_custom_call.1} parent=59 // pred_region
          %s1368 = sand.u32 %s160, 1
          %s1369 = scalar_lea.sflag [#allocation5], %s1368
          %s1370 = sand.u32 %s160, 1
          %s1371 = smul.addr %s1370, 512
          %s1372 = scalar_lea.vmem [#allocation8], %s1371
          %1373 = dma.done %s1369, 8192
        $region64: #{tpu_custom_call.1} parent=59 // pred_fallthru
          _
      $region60: #{tpu_custom_call.1} parent=5 // pred_fallthru
        _
    $region6: #{tpu_custom_call.1} parent=1 // loop_footer
      %s21 = sadd.s32 1, %s17
    $region7: #{tpu_custom_call.1} parent=1 // loop_footer_branch
      %16 = sbr.rel target = $region3
    $region8: #{tpu_custom_call.1} parent=1 // loop_exit
      _
    %1374 = vsyncpa [#allocation4], 1
    %s1375 = scalar_lea.sflag [#allocation4], 1
    %1376 = vsyncpa %s1375, 1
    %1377 = vsyncpa [#allocation7], 1
    %1378 = vsyncpa [#allocation5], 1
    %s1379 = scalar_lea.sflag [#allocation5], 1
    %1380 = vsyncpa %s1379, 1

</llo_original>
